<compile_context>
chip_gen: v7x
topology: tpu7x:2x2x1
jax: 0.10.0
libtpu: 0.0.40
codegen_flags: <defaults>
</compile_context>

<pallas_src>
import jax
import jax.numpy as jnp
from jax import lax
from jax.experimental import pallas as pl
from jax.experimental.pallas import tpu as pltpu

# Module constants (DeconvBlock defaults).
_K = 4
_STRIDE = 2
_PAD = 1
_EPS = 1e-5


def _vmem_capacity_bytes():
    try:
        return int(pltpu.get_tpu_info().vmem_capacity_bytes)
    except Exception:
        return 64 * 1024 * 1024   # conservative fallback (v7x per-TC VMEM)


_VMEM_CAP = _vmem_capacity_bytes()
# v7x: 64 MiB physical -> stay under 48 MiB; v5e/v6e: 128 MiB -> raise limit and tile bigger.
_VMEM_LIMIT = (100 << 20) if _VMEM_CAP >= (96 << 20) else (48 << 20)
_TARGET_BM = 1024 if _VMEM_CAP >= (96 << 20) else 512


def _pick_blocks(m_valid):
    """Pick GEMM / BN block-M sizes and the padded row count.

    Keeps >=2 grid steps whenever possible so ("parallel",) can use both v7x TensorCores,
    and uses bigger memory-bound tiles for the BN/ReLU kernel when the grid allows it.
    """
    bm = _TARGET_BM
    while bm > 256 and m_valid <= bm:
        bm //= 2
    mp = ((m_valid + 2 * bm - 1) // (2 * bm)) * (2 * bm)
    bn = 2 * bm if mp // (2 * bm) >= 2 else bm
    return bm, bn, mp


def _gemm_stats_kernel(a_ref, w_ref, y_ref, psum_ref, pssq_ref):
    """Per-tile GEMM (bf16 operands -> f32 accumulate) + unmasked per-column partial stats.

    a_ref: (tm, 4*Cin) bf16      w_ref: (4*Cin, Cp) bf16
    y_ref: (tm, Cp) bf16         psum_ref/pssq_ref: (1, 1, Cp) f32 per-tile partials
    Columns are laid out col = co*4 + (ph*2+pw); zero-padded columns beyond 4*Cout.
    Boundary base-positions that do not belong to a given phase are NOT masked here;
    their contribution is subtracted from the reduced stats in (tiny) XLA glue.
    Zero-padded rows of A contribute exactly zero, so they need no masking either.
    """
    y = jnp.dot(a_ref[...], w_ref[...], preferred_element_type=jnp.float32)
    y_ref[...] = y.astype(y_ref.dtype)          # bf16 store: halves the dominant HBM stream
    cp = y.shape[1]
    psum_ref[...] = jnp.sum(y, axis=0, keepdims=True).reshape(1, 1, cp)
    pssq_ref[...] = jnp.sum(y * y, axis=0, keepdims=True).reshape(1, 1, cp)


def _bn_relu_kernel(y_ref, scale_ref, shift_ref, o_ref):
    """Fused (y * scale + shift) then ReLU; scale/shift already fold mean/var/gamma/beta."""
    y = y_ref[...].astype(jnp.float32)
    o_ref[...] = jnp.maximum(y * scale_ref[...] + shift_ref[...], 0.0)


@jax.jit
def deconv_block_forward(x, w, b, gamma, beta):
    """DeconvBlock forward.

    x: (N, Cin, H, W) f32; w: (Cin, Cout, 4, 4) PyTorch ConvTranspose2d layout;
    b, gamma, beta: (Cout,).  Returns (N, Cout, 2H, 2W) f32.
    """
    N, Cin, H, W = x.shape
    Cin_w, Cout, K, K2 = w.shape
    assert Cin == Cin_w and K == _K and K2 == _K
    Hout = (H - 1) * _STRIDE - 2 * _PAD + _K     # = 2H
    Wout = (W - 1) * _STRIDE - 2 * _PAD + _K     # = 2W

    Cp = ((4 * Cout + 127) // 128) * 128         # lane-dense (padded) GEMM N dimension
    M_valid = N * (H + 1) * (W + 1)
    bm, bn, Mp = _pick_blocks(M_valid)

    # ---- glue: 2x2 patch matrix over the 1-padded NHWC input (phase-decomposed im2col) ----
    # TODO(synk): move this im2col into kernel 1 via manual DMA to avoid materializing A in HBM.
    xb = jnp.transpose(x, (0, 2, 3, 1)).astype(jnp.bfloat16)         # (N, H, W, Cin)
    xp = jnp.pad(xb, ((0, 0), (1, 1), (1, 1), (0, 0)))               # (N, H+2, W+2, Cin)
    patches = [xp[:, a:a + H + 1, bb:bb + W + 1, :] for a in (0, 1) for bb in (0, 1)]
    A = jnp.concatenate(patches, axis=-1).reshape(M_valid, 4 * Cin)  # (M, 4*Cin) bf16
    A = jnp.pad(A, ((0, Mp - M_valid), (0, 0)))                      # zero rows -> zero stats

    # Weight folded to (4*Cin, 4*Cout): row (a*2+b)*Cin+ci, col co*4+(ph*2+pw)
    # maps to w[ci, co, 3-2a-ph, 3-2b-pw]; zero-padded to Cp columns.  bf16 for the MXU.
    blocks = []
    for a in (0, 1):
        for bb in (0, 1):
            per_p4 = [w[:, :, 3 - 2 * a - ph, 3 - 2 * bb - pw]
                      for ph in (0, 1) for pw in (0, 1)]
            blocks.append(jnp.stack(per_p4, axis=-1).reshape(Cin, 4 * Cout))
    Wm = jnp.concatenate(blocks, axis=0)                              # (4*Cin, 4*Cout)
    Wm_p = jnp.pad(Wm, ((0, 0), (0, Cp - 4 * Cout))).astype(jnp.bfloat16)

    # NOTE: the ConvTranspose2d bias is intentionally NOT added: training-mode BatchNorm
    # subtracts the batch mean, so the bias cancels exactly in the final output.
    # (Not valid for eval-mode/running-stats BN.)
    del b

    # ---- Pallas kernel 1: bf16 GEMM -> bf16 y + per-tile unmasked column stats ----
    T = Mp // bm
    # TODO(synk): pipeline_mode=pl.Buffered(1) on the constant weight BlockSpec for v7x VMEM headroom.
    y_pad, psum, pssq = pl.pallas_call(
        _gemm_stats_kernel,
        out_shape=(jax.ShapeDtypeStruct((Mp, Cp), jnp.bfloat16),
                   jax.ShapeDtypeStruct((T, 1, Cp), jnp.float32),
                   jax.ShapeDtypeStruct((T, 1, Cp), jnp.float32)),
        grid_spec=pltpu.PrefetchScalarGridSpec(
            num_scalar_prefetch=0,
            grid=(T,),
            in_specs=[pl.BlockSpec((bm, 4 * Cin), lambda i: (i, 0)),
                      pl.BlockSpec((4 * Cin, Cp), lambda i: (0, 0))],
            out_specs=[pl.BlockSpec((bm, Cp), lambda i: (i, 0)),
                       pl.BlockSpec((1, 1, Cp), lambda i: (i, 0, 0)),
                       pl.BlockSpec((1, 1, Cp), lambda i: (i, 0, 0))]),
        compiler_params=pltpu.CompilerParams(
            dimension_semantics=("parallel",),
            vmem_limit_bytes=_VMEM_LIMIT),
    )(A, Wm_p)

    # ---- tiny XLA glue: reduce partials, subtract boundary contributions, build scale/shift ----
    sum_cols = jnp.sum(psum, axis=(0, 1))[: 4 * Cout]     # (4*Cout,)
    ssq_cols = jnp.sum(pssq, axis=(0, 1))[: 4 * Cout]

    # Phase (ph, pw) only covers base rows r in [ph, ph+H) and cols c in [pw, pw+W); the unmasked
    # kernel sums therefore over-count exactly one base row (er) and one base col (ec) per phase.
    # Subtract those contributions here; the data touched is only O(N*(H+W)*Cout).
    yb = (y_pad[:M_valid, : 4 * Cout]
          .reshape(N, H + 1, W + 1, 4 * Cout).astype(jnp.float32))

    def _reduce(v):
        return jnp.sum(v, axis=tuple(range(v.ndim - 1)))

    row_s = {r: _reduce(yb[:, r, :, :]) for r in (0, H)}
    col_s = {c: _reduce(yb[:, :, c, :]) for c in (0, W)}
    cor_s = {(r, c): _reduce(yb[:, r, c, :]) for r in (0, H) for c in (0, W)}
    row_q = {r: _reduce(jnp.square(yb[:, r, :, :])) for r in (0, H)}
    col_q = {c: _reduce(jnp.square(yb[:, :, c, :])) for c in (0, W)}
    cor_q = {(r, c): _reduce(jnp.square(yb[:, r, c, :])) for r in (0, H) for c in (0, W)}

    count = jnp.float32(N * Hout * Wout)
    sum_r = sum_cols.reshape(Cout, 4)
    ssq_r = ssq_cols.reshape(Cout, 4)
    ch_sum = jnp.zeros((Cout,), jnp.float32)
    ch_ssq = jnp.zeros((Cout,), jnp.float32)
    for ph in (0, 1):
        for pw in (0, 1):
            p4 = ph * 2 + pw
            er = H if ph == 0 else 0
            ec = W if pw == 0 else 0
            inv_s = (row_s[er] + col_s[ec] - cor_s[(er, ec)]).reshape(Cout, 4)[:, p4]
            inv_q = (row_q[er] + col_q[ec] - cor_q[(er, ec)]).reshape(Cout, 4)[:, p4]
            ch_sum = ch_sum + sum_r[:, p4] - inv_s
            ch_ssq = ch_ssq + ssq_r[:, p4] - inv_q

    mean = ch_sum / count
    ex2 = ch_ssq / count
    # TODO(synk): E[y^2]-E[y]^2 can cancel when |mean| >> std; clamp here, Welford merge next.
    var = jnp.maximum(ex2 - mean * mean, 0.0)
    inv = lax.rsqrt(var + _EPS)
    scale_c = gamma.astype(jnp.float32) * inv
    shift_c = beta.astype(jnp.float32) - mean * scale_c
    scale_cols = jnp.zeros((Cp,), jnp.float32).at[: 4 * Cout].set(
        jnp.repeat(scale_c, 4)).reshape(1, Cp)
    shift_cols = jnp.zeros((Cp,), jnp.float32).at[: 4 * Cout].set(
        jnp.repeat(shift_c, 4)).reshape(1, Cp)

    # ---- Pallas kernel 2: normalize + ReLU (bf16 in, f32 out), big memory-bound tiles ----
    T2 = Mp // bn
    out_pad = pl.pallas_call(
        _bn_relu_kernel,
        out_shape=jax.ShapeDtypeStruct((Mp, Cp), jnp.float32),
        grid_spec=pltpu.PrefetchScalarGridSpec(
            num_scalar_prefetch=0,
            grid=(T2,),
            in_specs=[pl.BlockSpec((bn, Cp), lambda i: (i, 0)),
                      pl.BlockSpec((1, Cp), lambda i: (0, 0)),
                      pl.BlockSpec((1, Cp), lambda i: (0, 0))],
            out_specs=pl.BlockSpec((bn, Cp), lambda i: (i, 0))),
        compiler_params=pltpu.CompilerParams(
            dimension_semantics=("parallel",),
            vmem_limit_bytes=_VMEM_LIMIT),
    )(y_pad, scale_cols, shift_cols)

    # ---- glue: contiguous pixel-shuffle into the (N, H, 2, W, 2, Cout) layout (no scatters, no
    #      zeros init), free reshape to NHWC, then the single unavoidable NHWC->NCHW transpose ----
    yv = out_pad[:M_valid, : 4 * Cout].reshape(N, H + 1, W + 1, Cout, 2, 2)
    rows = []
    for ph in (0, 1):
        slabs = [yv[:, ph:ph + H, pw:pw + W, :, ph, pw] for pw in (0, 1)]   # (N, H, W, Cout) each
        rows.append(jnp.stack(slabs, axis=3))                               # (N, H, W, 2, Cout)
    out6 = jnp.stack(rows, axis=2)                                          # (N, H, 2, W, 2, Cout)
    out_nhwc = out6.reshape(N, Hout, Wout, Cout)
    return jnp.transpose(out_nhwc, (0, 3, 1, 2))


def _reference(x, w, b, gamma, beta, eps=_EPS):
    """Independent f32 reference: ConvTranspose2d(4,2,1,bias) + BatchNorm2d(batch stats) + ReLU."""
    K = w.shape[2]
    x_nhwc = jnp.transpose(x, (0, 2, 3, 1)).astype(jnp.float32)
    w_hwio = jnp.transpose(w[:, :, ::-1, ::-1], (2, 3, 0, 1)).astype(jnp.float32)
    pe = K - 1 - _PAD
    y = lax.conv_general_dilated(
        x_nhwc, w_hwio, window_strides=(1, 1),
        padding=((pe, pe), (pe, pe)), lhs_dilation=(_STRIDE, _STRIDE),
        dimension_numbers=("NHWC", "HWIO", "NHWC"))
    y = y + b.reshape(1, 1, 1, -1)
    mean = jnp.mean(y, axis=(0, 1, 2))
    var = jnp.var(y, axis=(0, 1, 2))     # biased, as BatchNorm uses for normalization
    out = (y - mean) * lax.rsqrt(var + eps) * gamma + beta
    out = jnp.maximum(out, 0.0)
    return jnp.transpose(out, (0, 3, 1, 2))


if __name__ == "__main__":
    key = jax.random.PRNGKey(0)
    k_x, k_w, k_b, k_g, k_be = jax.random.split(key, 5)

    N, Cin, H, W = 2, 4, 16, 16
    Cout = 8

    x = jax.random.normal(k_x, (N, Cin, H, W), dtype=jnp.float32)
    w = 0.1 * jax.random.normal(k_w, (Cin, Cout, _K, _K), dtype=jnp.float32)
    b = 0.05 * jax.random.normal(k_b, (Cout,), dtype=jnp.float32)
    gamma = 1.0 + 0.1 * jax.random.normal(k_g, (Cout,), dtype=jnp.float32)
    beta = 0.1 * jax.random.normal(k_be, (Cout,), dtype=jnp.float32)

    out = jax.block_until_ready(deconv_block_forward(x, w, b, gamma, beta))

    ref = _reference(x, w, b, gamma, beta)
    assert out.shape == (N, Cout, 2 * H, 2 * W)
    assert jnp.allclose(out, ref, atol=3e-2, rtol=3e-2), float(jnp.max(jnp.abs(out - ref)))
    print("KERNEL_OK")
</pallas_src>

<mosaic_0001>
module attributes {stable_mosaic.version = 11 : i64} {
  func.func @_gemm_stats_kernel(%arg0: i32, %arg1: memref<512x16xbf16, #tpu.memory_space<vmem>>, %arg2: memref<16x128xbf16, #tpu.memory_space<vmem>>, %arg3: memref<512x128xbf16, #tpu.memory_space<vmem>>, %arg4: memref<1x1x128xf32, #tpu.memory_space<vmem>>, %arg5: memref<1x1x128xf32, #tpu.memory_space<vmem>>) attributes {dimension_semantics = [#tpu.dimension_semantics<parallel>], iteration_bounds = array<i64: 2>, scalar_prefetch = 0 : i64, scratch_operands = 0 : i64, tpu.core_type = #tpu.core_type<tc>, window_params = [{transform_indices = @transform_0, window_bounds = array<i64: 512, 16>}, {pipeline_mode = #tpu.pipeline_mode<synchronous>, transform_indices = @transform_1, window_bounds = array<i64: 16, 128>}, {transform_indices = @transform_2, window_bounds = array<i64: 512, 128>}, {transform_indices = @transform_3, window_bounds = array<i64: 1, 1, 128>}, {transform_indices = @transform_4, window_bounds = array<i64: 1, 1, 128>}]} {
    %c0 = arith.constant 0 : index
    %c0_0 = arith.constant 0 : index
    %0 = vector.load %arg1[%c0, %c0_0] : memref<512x16xbf16, #tpu.memory_space<vmem>>, vector<512x16xbf16>
    %c0_1 = arith.constant 0 : index
    %c0_2 = arith.constant 0 : index
    %1 = vector.load %arg2[%c0_1, %c0_2] : memref<16x128xbf16, #tpu.memory_space<vmem>>, vector<16x128xbf16>
    %cst = arith.constant dense<0.000000e+00> : vector<512x128xf32>
    %2 = tpu.matmul %0, %1, %cst {dimension_numbers = #tpu.dot_dimension_numbers<[1], [0], [0], [1], [0, 0, 1, 1], [], []>} : vector<512x16xbf16>, vector<16x128xbf16>, vector<512x128xf32> -> vector<512x128xf32>
    %3 = arith.truncf %2 : vector<512x128xf32> to vector<512x128xbf16>
    %c0_3 = arith.constant 0 : index
    %c0_4 = arith.constant 0 : index
    %4 = vector.load %arg3[%c0_3, %c0_4] : memref<512x128xbf16, #tpu.memory_space<vmem>>, vector<512x128xbf16>
    tpu.vector_store %arg3[%c0_3, %c0_4], %3 {strides = array<i32>} : memref<512x128xbf16, #tpu.memory_space<vmem>>, vector<512x128xbf16>,
    %cst_5 = arith.constant dense<0.000000e+00> : vector<128xf32>
    %5 = vector.multi_reduction <add>, %2, %cst_5 [0] : vector<512x128xf32> to vector<128xf32>
    %6 = vector.shape_cast %5 : vector<128xf32> to vector<1x128xf32>
    %7 = vector.shape_cast %6 : vector<1x128xf32> to vector<1x1x128xf32>
    %c0_6 = arith.constant 0 : index
    %c0_7 = arith.constant 0 : index
    %c0_8 = arith.constant 0 : index
    %8 = vector.load %arg4[%c0_6, %c0_7, %c0_8] : memref<1x1x128xf32, #tpu.memory_space<vmem>>, vector<1x1x128xf32>
    tpu.vector_store %arg4[%c0_6, %c0_7, %c0_8], %7 {strides = array<i32>} : memref<1x1x128xf32, #tpu.memory_space<vmem>>, vector<1x1x128xf32>,
    %9 = arith.mulf %2, %2 : vector<512x128xf32>
    %cst_9 = arith.constant dense<0.000000e+00> : vector<128xf32>
    %10 = vector.multi_reduction <add>, %9, %cst_9 [0] : vector<512x128xf32> to vector<128xf32>
    %11 = vector.shape_cast %10 : vector<128xf32> to vector<1x128xf32>
    %12 = vector.shape_cast %11 : vector<1x128xf32> to vector<1x1x128xf32>
    %c0_10 = arith.constant 0 : index
    %c0_11 = arith.constant 0 : index
    %c0_12 = arith.constant 0 : index
    %13 = vector.load %arg5[%c0_10, %c0_11, %c0_12] : memref<1x1x128xf32, #tpu.memory_space<vmem>>, vector<1x1x128xf32>
    tpu.vector_store %arg5[%c0_10, %c0_11, %c0_12], %12 {strides = array<i32>} : memref<1x1x128xf32, #tpu.memory_space<vmem>>, vector<1x1x128xf32>,
    return
  }
  func.func @transform_0(%arg0: i32) -> (i32, i32) {
    %c0_i32 = arith.constant 0 : i32
    %c0_i32_0 = arith.constant 0 : i32
    return %arg0, %c0_i32 : i32, i32
  }
  func.func @transform_1(%arg0: i32) -> (i32, i32) {
    %c0_i32 = arith.constant 0 : i32
    %c0_i32_0 = arith.constant 0 : i32
    %c0_i32_1 = arith.constant 0 : i32
    return %c0_i32, %c0_i32_0 : i32, i32
  }
  func.func @transform_2(%arg0: i32) -> (i32, i32) {
    %c0_i32 = arith.constant 0 : i32
    %c0_i32_0 = arith.constant 0 : i32
    return %arg0, %c0_i32 : i32, i32
  }
  func.func @transform_3(%arg0: i32) -> (i32, i32, i32) {
    %c0_i32 = arith.constant 0 : i32
    %c0_i32_0 = arith.constant 0 : i32
    %c0_i32_1 = arith.constant 0 : i32
    return %arg0, %c0_i32, %c0_i32_0 : i32, i32, i32
  }
  func.func @transform_4(%arg0: i32) -> (i32, i32, i32) {
    %c0_i32 = arith.constant 0 : i32
    %c0_i32_0 = arith.constant 0 : i32
    %c0_i32_1 = arith.constant 0 : i32
    return %arg0, %c0_i32, %c0_i32_0 : i32, i32, i32
  }
}

module attributes {stable_mosaic.version = 11 : i64} {
  func.func @_bn_relu_kernel(%arg0: i32, %arg1: memref<512x128xbf16, #tpu.memory_space<vmem>>, %arg2: memref<1x128xf32, #tpu.memory_space<vmem>>, %arg3: memref<1x128xf32, #tpu.memory_space<vmem>>, %arg4: memref<512x128xf32, #tpu.memory_space<vmem>>) attributes {dimension_semantics = [#tpu.dimension_semantics<parallel>], iteration_bounds = array<i64: 2>, scalar_prefetch = 0 : i64, scratch_operands = 0 : i64, tpu.core_type = #tpu.core_type<tc>, window_params = [{transform_indices = @transform_0, window_bounds = array<i64: 512, 128>}, {pipeline_mode = #tpu.pipeline_mode<synchronous>, transform_indices = @transform_1, window_bounds = array<i64: 1, 128>}, {pipeline_mode = #tpu.pipeline_mode<synchronous>, transform_indices = @transform_2, window_bounds = array<i64: 1, 128>}, {transform_indices = @transform_3, window_bounds = array<i64: 512, 128>}]} {
    %c0 = arith.constant 0 : index
    %c0_0 = arith.constant 0 : index
    %0 = vector.load %arg1[%c0, %c0_0] : memref<512x128xbf16, #tpu.memory_space<vmem>>, vector<512x128xbf16>
    %1 = arith.extf %0 : vector<512x128xbf16> to vector<512x128xf32>
    %c0_1 = arith.constant 0 : index
    %c0_2 = arith.constant 0 : index
    %2 = vector.load %arg2[%c0_1, %c0_2] : memref<1x128xf32, #tpu.memory_space<vmem>>, vector<1x128xf32>
    %3 = vector.broadcast %2 : vector<1x128xf32> to vector<512x128xf32>
    %4 = arith.mulf %1, %3 : vector<512x128xf32>
    %c0_3 = arith.constant 0 : index
    %c0_4 = arith.constant 0 : index
    %5 = vector.load %arg3[%c0_3, %c0_4] : memref<1x128xf32, #tpu.memory_space<vmem>>, vector<1x128xf32>
    %6 = vector.broadcast %5 : vector<1x128xf32> to vector<512x128xf32>
    %7 = arith.addf %4, %6 : vector<512x128xf32>
    %cst = arith.constant 0.000000e+00 : f32
    %8 = vector.broadcast %cst : f32 to vector<512x128xf32>
    %9 = arith.maximumf %7, %8 : vector<512x128xf32>
    %c0_5 = arith.constant 0 : index
    %c0_6 = arith.constant 0 : index
    %10 = vector.load %arg4[%c0_5, %c0_6] : memref<512x128xf32, #tpu.memory_space<vmem>>, vector<512x128xf32>
    tpu.vector_store %arg4[%c0_5, %c0_6], %9 {strides = array<i32>} : memref<512x128xf32, #tpu.memory_space<vmem>>, vector<512x128xf32>,
    return
  }
  func.func @transform_0(%arg0: i32) -> (i32, i32) {
    %c0_i32 = arith.constant 0 : i32
    %c0_i32_0 = arith.constant 0 : i32
    return %arg0, %c0_i32 : i32, i32
  }
  func.func @transform_1(%arg0: i32) -> (i32, i32) {
    %c0_i32 = arith.constant 0 : i32
    %c0_i32_0 = arith.constant 0 : i32
    %c0_i32_1 = arith.constant 0 : i32
    return %c0_i32, %c0_i32_0 : i32, i32
  }
  func.func @transform_2(%arg0: i32) -> (i32, i32) {
    %c0_i32 = arith.constant 0 : i32
    %c0_i32_0 = arith.constant 0 : i32
    %c0_i32_1 = arith.constant 0 : i32
    return %c0_i32, %c0_i32_0 : i32, i32
  }
  func.func @transform_3(%arg0: i32) -> (i32, i32) {
    %c0_i32 = arith.constant 0 : i32
    %c0_i32_0 = arith.constant 0 : i32
    return %arg0, %c0_i32 : i32, i32
  }
}

</mosaic_0001>

<llo_original>
// kernel: deconv_block_forward.2
$region0: #{deconv_block_forward.2}
  #allocation0 [shape = 'u32[]', space=smem, size = 0x4, offset = 0x4, fixed_abs, tag = 'smem constant byte address 0x4 - core index']
  #allocation1 [shape = 'u32[144,128]{1,0:T(1,128)}', space=vmem, size = 0x12000, scoped, tag = 'internal scratch']
  %s0 = inlined_call_operand.vmem [shape: bf16[1024,16], index: 0, kind: input, shape index: {}]
  %s1 = inlined_call_operand.vmem [shape: bf16[16,128], index: 1, kind: input, shape index: {}]
  %s2 = inlined_call_operand.vmem [shape: bf16[1024,128], index: 2, kind: output, shape index: {0}]
  %s3 = inlined_call_operand.vmem [shape: f32[2,1,128], index: 3, kind: output, shape index: {1}]
  %s4 = inlined_call_operand.vmem [shape: f32[2,1,128], index: 4, kind: output, shape index: {2}]
  %5 = xla_tuple %s2, %s3, %s4
  %s6 = sld [smem:[#allocation0]]
  $region57: #{deconv_block_forward.2} parent=0
    _
  %s8 = ssub.s32 1, %s6
  %s9 = scalar_select 0, %s8, %s6
  loop: start=0, step=1, limit=4
  $region2: #{deconv_block_forward.2} parent=0 // loop_pre_header
    _
  $region3: #{deconv_block_forward.2} parent=0 // loop_header
    %s11 = sphi 0, %s15
    %p12 = scmp.ge.s32.totalorder %s11, 4
    %s21 = sphi 0, %s23
    %s24 = sphi 0, %s21
    %s25 = sphi 0, %s24
    %s41 = sphi 0, %s25
    %s45 = sphi 0, %s45
    %s47 = sphi 0, %s45
    %s48 = sphi 0, %s47
    %s62 = sphi 0, %s48
    %s68 = sphi 0, %s70
    %s71 = sphi 0, %s68
    %s72 = sphi 0, %s71
    %s88 = sphi 0, %s72
    %s94 = sphi 0, %s96
    %s97 = sphi 0, %s94
    %s98 = sphi 0, %s97
    %s114 = sphi 0, %s98
    %s120 = sphi 0, %s122
    %s123 = sphi 0, %s120
    %s124 = sphi 0, %s123
    %s140 = sphi 0, %s124
  $region4: #{deconv_block_forward.2} parent=0 // loop_header_branch
    %14 = sbr.rel (%p12) target = $region8
  $region5: #{deconv_block_forward.2} parent=0 // loop_body
    %s16 = ssub.s32 %s11, 1
    %s17 = ssub.s32 %s11, 2
    %s18 = sadd.s32 %s11, 1
    %s19 = ssub.s32 %s11, %s18
    %p20 = scmp.eq.s32.totalorder %s19, 0
    %s22 = sadd.s32 %s21, 1
    %s23 = scalar_select %p20, %s21, %s22
    %p26 = pneg %p20
    %p27 = scmp.eq.s32.totalorder %s11, 1
    %p28 = por %p26, %p27
    %p29 = scmp.ne.s32.totalorder %s21, %s24
    %p30 = scmp.eq.s32.totalorder %s11, 0
    %p31 = por %p29, %p30
    %p32 = scmp.ne.s32.totalorder %s21, %s24
    %p33 = scmp.eq.s32.totalorder %s16, 1
    %p34 = por %p32, %p33
    %p35 = scmp.ne.s32.totalorder %s24, %s25
    %p36 = scmp.eq.s32.totalorder %s16, 0
    %p37 = por %p35, %p36
    %p38 = scmp.ne.s32.totalorder %s24, %s25
    %p39 = scmp.eq.s32.totalorder %s17, 1
    %p40 = por %p38, %p39
    %p42 = scmp.ne.s32.totalorder %s25, %s41
    %p43 = scmp.eq.s32.totalorder %s17, 0
    %p44 = por %p42, %p43
    %s46 = sadd.s32 %s45, 1
    %p49 = scmp.eq.s32.totalorder %s11, 1
    %p50 = scmp.ne.s32.totalorder %s45, %s47
    %p51 = scmp.eq.s32.totalorder %s11, 0
    %p52 = por %p50, %p51
    %p53 = scmp.ne.s32.totalorder %s45, %s47
    %p54 = scmp.eq.s32.totalorder %s16, 1
    %p55 = por %p53, %p54
    %p56 = scmp.ne.s32.totalorder %s47, %s48
    %p57 = scmp.eq.s32.totalorder %s16, 0
    %p58 = por %p56, %p57
    %p59 = scmp.ne.s32.totalorder %s47, %s48
    %p60 = scmp.eq.s32.totalorder %s17, 1
    %p61 = por %p59, %p60
    %p63 = scmp.ne.s32.totalorder %s48, %s62
    %p64 = scmp.eq.s32.totalorder %s17, 0
    %p65 = por %p63, %p64
    %s66 = ssub.s32 %s11, %s18
    %p67 = scmp.eq.s32.totalorder %s66, 0
    %s69 = sadd.s32 %s68, 1
    %s70 = scalar_select %p67, %s68, %s69
    %p73 = pneg %p67
    %p74 = scmp.eq.s32.totalorder %s11, 1
    %p75 = por %p73, %p74
    %p76 = scmp.ne.s32.totalorder %s68, %s71
    %p77 = scmp.eq.s32.totalorder %s11, 0
    %p78 = por %p76, %p77
    %p79 = scmp.ne.s32.totalorder %s68, %s71
    %p80 = scmp.eq.s32.totalorder %s16, 1
    %p81 = por %p79, %p80
    %p82 = scmp.ne.s32.totalorder %s71, %s72
    %p83 = scmp.eq.s32.totalorder %s16, 0
    %p84 = por %p82, %p83
    %p85 = scmp.ne.s32.totalorder %s71, %s72
    %p86 = scmp.eq.s32.totalorder %s17, 1
    %p87 = por %p85, %p86
    %p89 = scmp.ne.s32.totalorder %s72, %s88
    %p90 = scmp.eq.s32.totalorder %s17, 0
    %p91 = por %p89, %p90
    %s92 = ssub.s32 %s11, %s18
    %p93 = scmp.eq.s32.totalorder %s92, 0
    %s95 = sadd.s32 %s94, 1
    %s96 = scalar_select %p93, %s94, %s95
    %p99 = pneg %p93
    %p100 = scmp.eq.s32.totalorder %s11, 1
    %p101 = por %p99, %p100
    %p102 = scmp.ne.s32.totalorder %s94, %s97
    %p103 = scmp.eq.s32.totalorder %s11, 0
    %p104 = por %p102, %p103
    %p105 = scmp.ne.s32.totalorder %s94, %s97
    %p106 = scmp.eq.s32.totalorder %s16, 1
    %p107 = por %p105, %p106
    %p108 = scmp.ne.s32.totalorder %s97, %s98
    %p109 = scmp.eq.s32.totalorder %s16, 0
    %p110 = por %p108, %p109
    %p111 = scmp.ne.s32.totalorder %s97, %s98
    %p112 = scmp.eq.s32.totalorder %s17, 1
    %p113 = por %p111, %p112
    %p115 = scmp.ne.s32.totalorder %s98, %s114
    %p116 = scmp.eq.s32.totalorder %s17, 0
    %p117 = por %p115, %p116
    %s118 = ssub.s32 %s11, %s18
    %p119 = scmp.eq.s32.totalorder %s118, 0
    %s121 = sadd.s32 %s120, 1
    %s122 = scalar_select %p119, %s120, %s121
    %p125 = pneg %p119
    %p126 = scmp.eq.s32.totalorder %s11, 1
    %p127 = por %p125, %p126
    %p128 = scmp.ne.s32.totalorder %s120, %s123
    %p129 = scmp.eq.s32.totalorder %s11, 0
    %p130 = por %p128, %p129
    %p131 = scmp.ne.s32.totalorder %s120, %s123
    %p132 = scmp.eq.s32.totalorder %s16, 1
    %p133 = por %p131, %p132
    %p134 = scmp.ne.s32.totalorder %s123, %s124
    %p135 = scmp.eq.s32.totalorder %s16, 0
    %p136 = por %p134, %p135
    %p137 = scmp.ne.s32.totalorder %s123, %s124
    %p138 = scmp.eq.s32.totalorder %s17, 1
    %p139 = por %p137, %p138
    %p141 = scmp.ne.s32.totalorder %s124, %s140
    %p142 = scmp.eq.s32.totalorder %s17, 0
    %p143 = por %p141, %p142
    %p144 = scmp.le.s32.totalorder 1, %s11
    %p145 = scmp.lt.s32.totalorder %s11, 3
    %p146 = pnand %p144, %p145
    %p147 = pneg %p146
    // Predicated region
    $region9: #{deconv_block_forward.2} parent=5 // pred_check
      _
    $region10: #{deconv_block_forward.2} parent=5 // pred_check_branch
      %149 = sbr.rel (%p146) target = $region12
    $region11: #{deconv_block_forward.2} parent=5 // pred_region
      %s150 = ssub.s32 %s11, 1
      // Predicated region
      $region13: #{deconv_block_forward.2} parent=11 // pred_check
        %p151 = pneg %p58
      $region14: #{deconv_block_forward.2} parent=11 // pred_check_branch
        %153 = sbr.rel (%p151) target = $region16
      $region15: #{deconv_block_forward.2} parent=11 // pred_region
        _
      $region16: #{deconv_block_forward.2} parent=11 // pred_fallthru
        _
    $region12: #{deconv_block_forward.2} parent=5 // pred_fallthru
      _
    %p154 = scmp.lt.s32.totalorder %s11, 2
    // Predicated region
    $region17: #{deconv_block_forward.2} parent=5 // pred_check
      %p155 = pneg %p154
    $region18: #{deconv_block_forward.2} parent=5 // pred_check_branch
      %157 = sbr.rel (%p155) target = $region20
    $region19: #{deconv_block_forward.2} parent=5 // pred_region
      // Predicated region
      $region21: #{deconv_block_forward.2} parent=19 // pred_check
        %p158 = pneg %p31
      $region22: #{deconv_block_forward.2} parent=19 // pred_check_branch
        %160 = sbr.rel (%p158) target = $region24
      $region23: #{deconv_block_forward.2} parent=19 // pred_region
        %s161 = smul.u32 64, %s11
        %p162 = scmp.lt.s32.totalorder %s161, 127
        %s163 = scalar_select %p162, %s161, 127
        %s164 = smul.addr %s163, 4
        %s165 = scalar_lea.vmem %s0, %s164
        %s166 = smul.u32 64, %s11
      $region24: #{deconv_block_forward.2} parent=19 // pred_fallthru
        _
    $region20: #{deconv_block_forward.2} parent=5 // pred_fallthru
      _
    %p167 = scmp.le.s32.totalorder 1, %s11
    %p168 = scmp.lt.s32.totalorder %s11, 3
    %p169 = pnand %p167, %p168
    %p170 = pneg %p169
    // Predicated region
    $region25: #{deconv_block_forward.2} parent=5 // pred_check
      _
    $region26: #{deconv_block_forward.2} parent=5 // pred_check_branch
      %172 = sbr.rel (%p169) target = $region28
    $region27: #{deconv_block_forward.2} parent=5 // pred_region
      %s173 = ssub.s32 %s11, 1
      %s174 = smul.u32 64, %s16
      %p175 = scmp.lt.s32.totalorder %s174, 127
      %s176 = scalar_select %p175, %s174, 127
      %s177 = smul.addr %s176, 4
      %s178 = scalar_lea.vmem %s0, %s177
      %p179 = pneg %p37
      %p180 = pneg %p34
      %p181 = pneg %p58
      %p182 = pneg %p55
      %p183 = pneg %p84
      %p184 = pneg %p81
      %s185 = smul.u32 64, %s16
      %p186 = scmp.lt.s32.totalorder %s185, 127
      %s187 = scalar_select %p186, %s185, 127
      %s188 = smul.addr %s187, 4
      %s189 = scalar_lea.vmem %s2, %s188
      %p190 = pneg %p110
      %p191 = pneg %p107
      %p192 = scmp.lt.s32.totalorder %s16, 1
      %s193 = scalar_select %p192, %s16, 1
      %s194 = scalar_lea.vmem %s3, %s193
      %p195 = pneg %p136
      %p196 = pneg %p133
      %p197 = scmp.lt.s32.totalorder %s16, 1
      %s198 = scalar_select %p197, %s16, 1
      %s199 = scalar_lea.vmem %s4, %s198
      %s200 = smul.u32 64, %s16
      %p201 = scmp.lt.s32.totalorder %s200, 127
      %s202 = scalar_select %p201, %s200, 127
      %s203 = smul.addr %s202, 4
      %s204 = scalar_lea.vmem %s0, %s203
      %s205 = smul.u32 64, %s16
      %s206 = smul.u32 64, %s16
      %p207 = scmp.lt.s32.totalorder %s206, 127
      %s208 = scalar_select %p207, %s206, 127
      %s209 = smul.addr %s208, 4
      %s210 = scalar_lea.vmem %s2, %s209
      %s211 = smul.u32 64, %s16
      %p212 = scmp.lt.s32.totalorder %s16, 1
      %s213 = scalar_select %p212, %s16, 1
      %s214 = scalar_lea.vmem %s3, %s213
      %p215 = scmp.lt.s32.totalorder %s16, 1
      %s216 = scalar_select %p215, %s16, 1
      %s217 = scalar_lea.vmem %s4, %s216
      %v219 = vld [vmem:[%s204] sm:$0xf]
      %v220 = vld [vmem:[%s204 + $0x4] sm:$0xf]
      %v221 = vld [vmem:[%s204 + $0x8] sm:$0xf]
      %v222 = vld [vmem:[%s204 + $0xc] sm:$0xf]
      %v223 = vld [vmem:[%s204 + $0x10] sm:$0xf]
      %v224 = vld [vmem:[%s204 + $0x14] sm:$0xf]
      %v225 = vld [vmem:[%s204 + $0x18] sm:$0xf]
      %v226 = vld [vmem:[%s204 + $0x1c] sm:$0xf]
      %v227 = vld [vmem:[%s204 + $0x20] sm:$0xf]
      %v228 = vld [vmem:[%s204 + $0x24] sm:$0xf]
      %v229 = vld [vmem:[%s204 + $0x28] sm:$0xf]
      %v230 = vld [vmem:[%s204 + $0x2c] sm:$0xf]
      %v231 = vld [vmem:[%s204 + $0x30] sm:$0xf]
      %v232 = vld [vmem:[%s204 + $0x34] sm:$0xf]
      %v233 = vld [vmem:[%s204 + $0x38] sm:$0xf]
      %v234 = vld [vmem:[%s204 + $0x3c] sm:$0xf]
      %v235 = vld [vmem:[%s204 + $0x40] sm:$0xf]
      %v236 = vld [vmem:[%s204 + $0x44] sm:$0xf]
      %v237 = vld [vmem:[%s204 + $0x48] sm:$0xf]
      %v238 = vld [vmem:[%s204 + $0x4c] sm:$0xf]
      %v239 = vld [vmem:[%s204 + $0x50] sm:$0xf]
      %v240 = vld [vmem:[%s204 + $0x54] sm:$0xf]
      %v241 = vld [vmem:[%s204 + $0x58] sm:$0xf]
      %v242 = vld [vmem:[%s204 + $0x5c] sm:$0xf]
      %v243 = vld [vmem:[%s204 + $0x60] sm:$0xf]
      %v244 = vld [vmem:[%s204 + $0x64] sm:$0xf]
      %v245 = vld [vmem:[%s204 + $0x68] sm:$0xf]
      %v246 = vld [vmem:[%s204 + $0x6c] sm:$0xf]
      %v247 = vld [vmem:[%s204 + $0x70] sm:$0xf]
      %v248 = vld [vmem:[%s204 + $0x74] sm:$0xf]
      %v249 = vld [vmem:[%s204 + $0x78] sm:$0xf]
      %v250 = vld [vmem:[%s204 + $0x7c] sm:$0xf]
      %v251 = vld [vmem:[%s204 + $0x80] sm:$0xf]
      %v252 = vld [vmem:[%s204 + $0x84] sm:$0xf]
      %v253 = vld [vmem:[%s204 + $0x88] sm:$0xf]
      %v254 = vld [vmem:[%s204 + $0x8c] sm:$0xf]
      %v255 = vld [vmem:[%s204 + $0x90] sm:$0xf]
      %v256 = vld [vmem:[%s204 + $0x94] sm:$0xf]
      %v257 = vld [vmem:[%s204 + $0x98] sm:$0xf]
      %v258 = vld [vmem:[%s204 + $0x9c] sm:$0xf]
      %v259 = vld [vmem:[%s204 + $0xa0] sm:$0xf]
      %v260 = vld [vmem:[%s204 + $0xa4] sm:$0xf]
      %v261 = vld [vmem:[%s204 + $0xa8] sm:$0xf]
      %v262 = vld [vmem:[%s204 + $0xac] sm:$0xf]
      %v263 = vld [vmem:[%s204 + $0xb0] sm:$0xf]
      %v264 = vld [vmem:[%s204 + $0xb4] sm:$0xf]
      %v265 = vld [vmem:[%s204 + $0xb8] sm:$0xf]
      %v266 = vld [vmem:[%s204 + $0xbc] sm:$0xf]
      %v267 = vld [vmem:[%s204 + $0xc0] sm:$0xf]
      %v268 = vld [vmem:[%s204 + $0xc4] sm:$0xf]
      %v269 = vld [vmem:[%s204 + $0xc8] sm:$0xf]
      %v270 = vld [vmem:[%s204 + $0xcc] sm:$0xf]
      %v271 = vld [vmem:[%s204 + $0xd0] sm:$0xf]
      %v272 = vld [vmem:[%s204 + $0xd4] sm:$0xf]
      %v273 = vld [vmem:[%s204 + $0xd8] sm:$0xf]
      %v274 = vld [vmem:[%s204 + $0xdc] sm:$0xf]
      %v275 = vld [vmem:[%s204 + $0xe0] sm:$0xf]
      %v276 = vld [vmem:[%s204 + $0xe4] sm:$0xf]
      %v277 = vld [vmem:[%s204 + $0xe8] sm:$0xf]
      %v278 = vld [vmem:[%s204 + $0xec] sm:$0xf]
      %v279 = vld [vmem:[%s204 + $0xf0] sm:$0xf]
      %v280 = vld [vmem:[%s204 + $0xf4] sm:$0xf]
      %v281 = vld [vmem:[%s204 + $0xf8] sm:$0xf]
      %v282 = vld [vmem:[%s204 + $0xfc] sm:$0xf]
      %v283 = vld [vmem:[%s1] sm:$0xf]
      %v284 = vld [vmem:[%s1 + $0x4] sm:$0xf]
      %v349 = vunpack.c.l.b16 %v219
      %v350 = vunpack.c.l.b16 %v220
      %v351 = vunpack.c.l.b16 %v221
      %v352 = vunpack.c.l.b16 %v222
      %v353 = vunpack.c.l.b16 %v223
      %v354 = vunpack.c.l.b16 %v224
      %v355 = vunpack.c.l.b16 %v225
      %v356 = vunpack.c.l.b16 %v226
      %v357 = vunpack.c.l.b16 %v227
      %v358 = vunpack.c.l.b16 %v228
      %v359 = vunpack.c.l.b16 %v229
      %v360 = vunpack.c.l.b16 %v230
      %v361 = vunpack.c.l.b16 %v231
      %v362 = vunpack.c.l.b16 %v232
      %v363 = vunpack.c.l.b16 %v233
      %v364 = vunpack.c.l.b16 %v234
      %v365 = vunpack.c.l.b16 %v235
      %v366 = vunpack.c.l.b16 %v236
      %v367 = vunpack.c.l.b16 %v237
      %v368 = vunpack.c.l.b16 %v238
      %v369 = vunpack.c.l.b16 %v239
      %v370 = vunpack.c.l.b16 %v240
      %v371 = vunpack.c.l.b16 %v241
      %v372 = vunpack.c.l.b16 %v242
      %v373 = vunpack.c.l.b16 %v243
      %v374 = vunpack.c.l.b16 %v244
      %v375 = vunpack.c.l.b16 %v245
      %v376 = vunpack.c.l.b16 %v246
      %v377 = vunpack.c.l.b16 %v247
      %v378 = vunpack.c.l.b16 %v248
      %v379 = vunpack.c.l.b16 %v249
      %v380 = vunpack.c.l.b16 %v250
      %v381 = vunpack.c.l.b16 %v251
      %v382 = vunpack.c.l.b16 %v252
      %v383 = vunpack.c.l.b16 %v253
      %v384 = vunpack.c.l.b16 %v254
      %v385 = vunpack.c.l.b16 %v255
      %v386 = vunpack.c.l.b16 %v256
      %v387 = vunpack.c.l.b16 %v257
      %v388 = vunpack.c.l.b16 %v258
      %v389 = vunpack.c.l.b16 %v259
      %v390 = vunpack.c.l.b16 %v260
      %v391 = vunpack.c.l.b16 %v261
      %v392 = vunpack.c.l.b16 %v262
      %v393 = vunpack.c.l.b16 %v263
      %v394 = vunpack.c.l.b16 %v264
      %v395 = vunpack.c.l.b16 %v265
      %v396 = vunpack.c.l.b16 %v266
      %v397 = vunpack.c.l.b16 %v267
      %v398 = vunpack.c.l.b16 %v268
      %v399 = vunpack.c.l.b16 %v269
      %v400 = vunpack.c.l.b16 %v270
      %v401 = vunpack.c.l.b16 %v271
      %v402 = vunpack.c.l.b16 %v272
      %v403 = vunpack.c.l.b16 %v273
      %v404 = vunpack.c.l.b16 %v274
      %v405 = vunpack.c.l.b16 %v275
      %v406 = vunpack.c.l.b16 %v276
      %v407 = vunpack.c.l.b16 %v277
      %v408 = vunpack.c.l.b16 %v278
      %v409 = vunpack.c.l.b16 %v279
      %v410 = vunpack.c.l.b16 %v280
      %v411 = vunpack.c.l.b16 %v281
      %v412 = vunpack.c.l.b16 %v282
      %v413 = vpack.c.b16 %v350, %v349
      %v414 = vpack.c.b16 %v352, %v351
      %v415 = vpack.c.b16 %v354, %v353
      %v416 = vpack.c.b16 %v356, %v355
      %v417 = vpack.c.b16 %v358, %v357
      %v418 = vpack.c.b16 %v360, %v359
      %v419 = vpack.c.b16 %v362, %v361
      %v420 = vpack.c.b16 %v364, %v363
      %v421 = vpack.c.b16 %v366, %v365
      %v422 = vpack.c.b16 %v368, %v367
      %v423 = vpack.c.b16 %v370, %v369
      %v424 = vpack.c.b16 %v372, %v371
      %v425 = vpack.c.b16 %v374, %v373
      %v426 = vpack.c.b16 %v376, %v375
      %v427 = vpack.c.b16 %v378, %v377
      %v428 = vpack.c.b16 %v380, %v379
      %v429 = vpack.c.b16 %v382, %v381
      %v430 = vpack.c.b16 %v384, %v383
      %v431 = vpack.c.b16 %v386, %v385
      %v432 = vpack.c.b16 %v388, %v387
      %v433 = vpack.c.b16 %v390, %v389
      %v434 = vpack.c.b16 %v392, %v391
      %v435 = vpack.c.b16 %v394, %v393
      %v436 = vpack.c.b16 %v396, %v395
      %v437 = vpack.c.b16 %v398, %v397
      %v438 = vpack.c.b16 %v400, %v399
      %v439 = vpack.c.b16 %v402, %v401
      %v440 = vpack.c.b16 %v404, %v403
      %v441 = vpack.c.b16 %v406, %v405
      %v442 = vpack.c.b16 %v408, %v407
      %v443 = vpack.c.b16 %v410, %v409
      %v444 = vpack.c.b16 %v412, %v411
      %v447 = vunpack.c.l.b16 %v283
      %v448 = vunpack.c.l.b16 %v284
      %v449 = vpack.c.b16 %v448, %v447
      %vm451 = vcmask 130048
      %v453 = vsel %vm451, %v413, 0
      %v456 = vsel %vm451, %v414, 0
      %v459 = vsel %vm451, %v415, 0
      %v462 = vsel %vm451, %v416, 0
      %v465 = vsel %vm451, %v417, 0
      %v468 = vsel %vm451, %v418, 0
      %v471 = vsel %vm451, %v419, 0
      %v474 = vsel %vm451, %v420, 0
      %v477 = vsel %vm451, %v421, 0
      %v480 = vsel %vm451, %v422, 0
      %v483 = vsel %vm451, %v423, 0
      %v486 = vsel %vm451, %v424, 0
      %v489 = vsel %vm451, %v425, 0
      %v492 = vsel %vm451, %v426, 0
      %v495 = vsel %vm451, %v427, 0
      %v498 = vsel %vm451, %v428, 0
      %v501 = vsel %vm451, %v429, 0
      %v504 = vsel %vm451, %v430, 0
      %v507 = vsel %vm451, %v431, 0
      %v510 = vsel %vm451, %v432, 0
      %v513 = vsel %vm451, %v433, 0
      %v516 = vsel %vm451, %v434, 0
      %v519 = vsel %vm451, %v435, 0
      %v522 = vsel %vm451, %v436, 0
      %v525 = vsel %vm451, %v437, 0
      %v528 = vsel %vm451, %v438, 0
      %v531 = vsel %vm451, %v439, 0
      %v534 = vsel %vm451, %v440, 0
      %v537 = vsel %vm451, %v441, 0
      %v540 = vsel %vm451, %v442, 0
      %v543 = vsel %vm451, %v443, 0
      %v546 = vsel %vm451, %v444, 0
      %548 = vmatprep.subr.bf16.mxu0 0
      %549 = vmatpush1.bf16.msra.mxu0 %v449
      %550 = vmatprep.subr.bf16.mxu0 0
      %551 = vmatpush1.bf16.msra.mxu0 0
      %552 = vmatprep.subr.bf16.mxu0 0
      %553 = vmatpush1.bf16.msra.mxu0 0
      %554 = vmatprep.subr.bf16.mxu0 0
      %555 = vmatpush1.bf16.msra.mxu0 0
      %556 = vmatprep.subr.bf16.mxu0 0
      %557 = vmatpush1.bf16.msra.mxu0 0
      %558 = vmatprep.subr.bf16.mxu0 0
      %559 = vmatpush1.bf16.msra.mxu0 0
      %560 = vmatprep.subr.bf16.mxu0 0
      %561 = vmatpush1.bf16.msra.mxu0 0
      %562 = vmatprep.subr.bf16.mxu0 0
      %563 = vmatpush1.bf16.msra.mxu0 0
      %564 = vmatprep.subr.bf16.mxu0 0
      %565 = vmatpush1.bf16.msra.mxu0 0
      %566 = vmatprep.subr.bf16.mxu0 0
      %567 = vmatpush1.bf16.msra.mxu0 0
      %568 = vmatprep.subr.bf16.mxu0 0
      %569 = vmatpush1.bf16.msra.mxu0 0
      %570 = vmatprep.subr.bf16.mxu0 0
      %571 = vmatpush1.bf16.msra.mxu0 0
      %572 = vmatprep.subr.bf16.mxu0 0
      %573 = vmatpush1.bf16.msra.mxu0 0
      %574 = vmatprep.subr.bf16.mxu0 0
      %575 = vmatpush1.bf16.msra.mxu0 0
      %576 = vmatprep.subr.bf16.mxu0 0
      %577 = vmatpush1.bf16.msra.mxu0 0
      %578 = vmatprep.subr.bf16.mxu0 0
      %579 = vmatpush1.bf16.msra.mxu0 0
      %580 = vmatprep.mubr.bf16.mxu0 0
      %581 = vmatmul.mubr.bf16.gmra.mrb[0].mxu0 %v453
      %v582 = vpop.f32.mrb[0].mxu0
      %v583 = vadd.f32 0.0, %v582
      %v584 = vpop.f32.mrb[0].mxu0
      %v585 = vpop.f32.mrb[0].mxu0
      %v586 = vadd.f32 0.0, %v585
      %v587 = vpop.f32.mrb[0].mxu0
      %588 = vmatprep.mubr.bf16.mxu0 0
      %589 = vmatmul.mubr.bf16.gmra.mrb[0].mxu0 %v456
      %v590 = vpop.f32.mrb[0].mxu0
      %v591 = vadd.f32 0.0, %v590
      %v592 = vpop.f32.mrb[0].mxu0
      %v593 = vpop.f32.mrb[0].mxu0
      %v594 = vadd.f32 0.0, %v593
      %v595 = vpop.f32.mrb[0].mxu0
      %596 = vmatprep.mubr.bf16.mxu0 0
      %597 = vmatmul.mubr.bf16.gmra.mrb[0].mxu0 %v459
      %v598 = vpop.f32.mrb[0].mxu0
      %v599 = vadd.f32 0.0, %v598
      %v600 = vpop.f32.mrb[0].mxu0
      %v601 = vpop.f32.mrb[0].mxu0
      %v602 = vadd.f32 0.0, %v601
      %v603 = vpop.f32.mrb[0].mxu0
      %604 = vmatprep.mubr.bf16.mxu0 0
      %605 = vmatmul.mubr.bf16.gmra.mrb[0].mxu0 %v462
      %v606 = vpop.f32.mrb[0].mxu0
      %v607 = vadd.f32 0.0, %v606
      %v608 = vpop.f32.mrb[0].mxu0
      %v609 = vpop.f32.mrb[0].mxu0
      %v610 = vadd.f32 0.0, %v609
      %v611 = vpop.f32.mrb[0].mxu0
      %612 = vmatprep.mubr.bf16.mxu0 0
      %613 = vmatmul.mubr.bf16.gmra.mrb[0].mxu0 %v465
      %v614 = vpop.f32.mrb[0].mxu0
      %v615 = vadd.f32 0.0, %v614
      %v616 = vpop.f32.mrb[0].mxu0
      %v617 = vpop.f32.mrb[0].mxu0
      %v618 = vadd.f32 0.0, %v617
      %v619 = vpop.f32.mrb[0].mxu0
      %620 = vmatprep.mubr.bf16.mxu0 0
      %621 = vmatmul.mubr.bf16.gmra.mrb[0].mxu0 %v468
      %v622 = vpop.f32.mrb[0].mxu0
      %v623 = vadd.f32 0.0, %v622
      %v624 = vpop.f32.mrb[0].mxu0
      %v625 = vpop.f32.mrb[0].mxu0
      %v626 = vadd.f32 0.0, %v625
      %v627 = vpop.f32.mrb[0].mxu0
      %628 = vmatprep.mubr.bf16.mxu0 0
      %629 = vmatmul.mubr.bf16.gmra.mrb[0].mxu0 %v471
      %v630 = vpop.f32.mrb[0].mxu0
      %v631 = vadd.f32 0.0, %v630
      %v632 = vpop.f32.mrb[0].mxu0
      %v633 = vpop.f32.mrb[0].mxu0
      %v634 = vadd.f32 0.0, %v633
      %v635 = vpop.f32.mrb[0].mxu0
      %636 = vmatprep.mubr.bf16.mxu0 0
      %637 = vmatmul.mubr.bf16.gmra.mrb[0].mxu0 %v474
      %v638 = vpop.f32.mrb[0].mxu0
      %v639 = vadd.f32 0.0, %v638
      %v640 = vpop.f32.mrb[0].mxu0
      %v641 = vpop.f32.mrb[0].mxu0
      %v642 = vadd.f32 0.0, %v641
      %v643 = vpop.f32.mrb[0].mxu0
      %644 = vmatprep.mubr.bf16.mxu0 0
      %645 = vmatmul.mubr.bf16.gmra.mrb[0].mxu0 %v477
      %v646 = vpop.f32.mrb[0].mxu0
      %v647 = vadd.f32 0.0, %v646
      %v648 = vpop.f32.mrb[0].mxu0
      %v649 = vpop.f32.mrb[0].mxu0
      %v650 = vadd.f32 0.0, %v649
      %v651 = vpop.f32.mrb[0].mxu0
      %652 = vmatprep.mubr.bf16.mxu0 0
      %653 = vmatmul.mubr.bf16.gmra.mrb[0].mxu0 %v480
      %v654 = vpop.f32.mrb[0].mxu0
      %v655 = vadd.f32 0.0, %v654
      %v656 = vpop.f32.mrb[0].mxu0
      %v657 = vpop.f32.mrb[0].mxu0
      %v658 = vadd.f32 0.0, %v657
      %v659 = vpop.f32.mrb[0].mxu0
      %660 = vmatprep.mubr.bf16.mxu0 0
      %661 = vmatmul.mubr.bf16.gmra.mrb[0].mxu0 %v483
      %v662 = vpop.f32.mrb[0].mxu0
      %v663 = vadd.f32 0.0, %v662
      %v664 = vpop.f32.mrb[0].mxu0
      %v665 = vpop.f32.mrb[0].mxu0
      %v666 = vadd.f32 0.0, %v665
      %v667 = vpop.f32.mrb[0].mxu0
      %668 = vmatprep.mubr.bf16.mxu0 0
      %669 = vmatmul.mubr.bf16.gmra.mrb[0].mxu0 %v486
      %v670 = vpop.f32.mrb[0].mxu0
      %v671 = vadd.f32 0.0, %v670
      %v672 = vpop.f32.mrb[0].mxu0
      %v673 = vpop.f32.mrb[0].mxu0
      %v674 = vadd.f32 0.0, %v673
      %v675 = vpop.f32.mrb[0].mxu0
      %676 = vmatprep.mubr.bf16.mxu0 0
      %677 = vmatmul.mubr.bf16.gmra.mrb[0].mxu0 %v489
      %v678 = vpop.f32.mrb[0].mxu0
      %v679 = vadd.f32 0.0, %v678
      %v680 = vpop.f32.mrb[0].mxu0
      %v681 = vpop.f32.mrb[0].mxu0
      %v682 = vadd.f32 0.0, %v681
      %v683 = vpop.f32.mrb[0].mxu0
      %684 = vmatprep.mubr.bf16.mxu0 0
      %685 = vmatmul.mubr.bf16.gmra.mrb[0].mxu0 %v492
      %v686 = vpop.f32.mrb[0].mxu0
      %v687 = vadd.f32 0.0, %v686
      %v688 = vpop.f32.mrb[0].mxu0
      %v689 = vpop.f32.mrb[0].mxu0
      %v690 = vadd.f32 0.0, %v689
      %v691 = vpop.f32.mrb[0].mxu0
      %692 = vmatprep.mubr.bf16.mxu0 0
      %693 = vmatmul.mubr.bf16.gmra.mrb[0].mxu0 %v495
      %v694 = vpop.f32.mrb[0].mxu0
      %v695 = vadd.f32 0.0, %v694
      %v696 = vpop.f32.mrb[0].mxu0
      %v697 = vpop.f32.mrb[0].mxu0
      %v698 = vadd.f32 0.0, %v697
      %v699 = vpop.f32.mrb[0].mxu0
      %700 = vmatprep.mubr.bf16.mxu0 0
      %701 = vmatmul.mubr.bf16.gmra.mrb[0].mxu0 %v498
      %v702 = vpop.f32.mrb[0].mxu0
      %v703 = vadd.f32 0.0, %v702
      %v704 = vpop.f32.mrb[0].mxu0
      %v705 = vpop.f32.mrb[0].mxu0
      %v706 = vadd.f32 0.0, %v705
      %v707 = vpop.f32.mrb[0].mxu0
      %708 = vmatprep.mubr.bf16.mxu0 0
      %709 = vmatmul.mubr.bf16.gmra.mrb[0].mxu0 %v501
      %v710 = vpop.f32.mrb[0].mxu0
      %v711 = vadd.f32 0.0, %v710
      %v712 = vpop.f32.mrb[0].mxu0
      %v713 = vpop.f32.mrb[0].mxu0
      %v714 = vadd.f32 0.0, %v713
      %v715 = vpop.f32.mrb[0].mxu0
      %716 = vmatprep.mubr.bf16.mxu0 0
      %717 = vmatmul.mubr.bf16.gmra.mrb[0].mxu0 %v504
      %v718 = vpop.f32.mrb[0].mxu0
      %v719 = vadd.f32 0.0, %v718
      %v720 = vpop.f32.mrb[0].mxu0
      %v721 = vpop.f32.mrb[0].mxu0
      %v722 = vadd.f32 0.0, %v721
      %v723 = vpop.f32.mrb[0].mxu0
      %724 = vmatprep.mubr.bf16.mxu0 0
      %725 = vmatmul.mubr.bf16.gmra.mrb[0].mxu0 %v507
      %v726 = vpop.f32.mrb[0].mxu0
      %v727 = vadd.f32 0.0, %v726
      %v728 = vpop.f32.mrb[0].mxu0
      %v729 = vpop.f32.mrb[0].mxu0
      %v730 = vadd.f32 0.0, %v729
      %v731 = vpop.f32.mrb[0].mxu0
      %732 = vmatprep.mubr.bf16.mxu0 0
      %733 = vmatmul.mubr.bf16.gmra.mrb[0].mxu0 %v510
      %v734 = vpop.f32.mrb[0].mxu0
      %v735 = vadd.f32 0.0, %v734
      %v736 = vpop.f32.mrb[0].mxu0
      %v737 = vpop.f32.mrb[0].mxu0
      %v738 = vadd.f32 0.0, %v737
      %v739 = vpop.f32.mrb[0].mxu0
      %740 = vmatprep.mubr.bf16.mxu0 0
      %741 = vmatmul.mubr.bf16.gmra.mrb[0].mxu0 %v513
      %v742 = vpop.f32.mrb[0].mxu0
      %v743 = vadd.f32 0.0, %v742
      %v744 = vpop.f32.mrb[0].mxu0
      %v745 = vpop.f32.mrb[0].mxu0
      %v746 = vadd.f32 0.0, %v745
      %v747 = vpop.f32.mrb[0].mxu0
      %748 = vmatprep.mubr.bf16.mxu0 0
      %749 = vmatmul.mubr.bf16.gmra.mrb[0].mxu0 %v516
      %v750 = vpop.f32.mrb[0].mxu0
      %v751 = vadd.f32 0.0, %v750
      %v752 = vpop.f32.mrb[0].mxu0
      %v753 = vpop.f32.mrb[0].mxu0
      %v754 = vadd.f32 0.0, %v753
      %v755 = vpop.f32.mrb[0].mxu0
      %756 = vmatprep.mubr.bf16.mxu0 0
      %757 = vmatmul.mubr.bf16.gmra.mrb[0].mxu0 %v519
      %v758 = vpop.f32.mrb[0].mxu0
      %v759 = vadd.f32 0.0, %v758
      %v760 = vpop.f32.mrb[0].mxu0
      %v761 = vpop.f32.mrb[0].mxu0
      %v762 = vadd.f32 0.0, %v761
      %v763 = vpop.f32.mrb[0].mxu0
      %764 = vmatprep.mubr.bf16.mxu0 0
      %765 = vmatmul.mubr.bf16.gmra.mrb[0].mxu0 %v522
      %v766 = vpop.f32.mrb[0].mxu0
      %v767 = vadd.f32 0.0, %v766
      %v768 = vpop.f32.mrb[0].mxu0
      %v769 = vpop.f32.mrb[0].mxu0
      %v770 = vadd.f32 0.0, %v769
      %v771 = vpop.f32.mrb[0].mxu0
      %772 = vmatprep.mubr.bf16.mxu0 0
      %773 = vmatmul.mubr.bf16.gmra.mrb[0].mxu0 %v525
      %v774 = vpop.f32.mrb[0].mxu0
      %v775 = vadd.f32 0.0, %v774
      %v776 = vpop.f32.mrb[0].mxu0
      %v777 = vpop.f32.mrb[0].mxu0
      %v778 = vadd.f32 0.0, %v777
      %v779 = vpop.f32.mrb[0].mxu0
      %780 = vmatprep.mubr.bf16.mxu0 0
      %781 = vmatmul.mubr.bf16.gmra.mrb[0].mxu0 %v528
      %v782 = vpop.f32.mrb[0].mxu0
      %v783 = vadd.f32 0.0, %v782
      %v784 = vpop.f32.mrb[0].mxu0
      %v785 = vpop.f32.mrb[0].mxu0
      %v786 = vadd.f32 0.0, %v785
      %v787 = vpop.f32.mrb[0].mxu0
      %788 = vmatprep.mubr.bf16.mxu0 0
      %789 = vmatmul.mubr.bf16.gmra.mrb[0].mxu0 %v531
      %v790 = vpop.f32.mrb[0].mxu0
      %v791 = vadd.f32 0.0, %v790
      %v792 = vpop.f32.mrb[0].mxu0
      %v793 = vpop.f32.mrb[0].mxu0
      %v794 = vadd.f32 0.0, %v793
      %v795 = vpop.f32.mrb[0].mxu0
      %796 = vmatprep.mubr.bf16.mxu0 0
      %797 = vmatmul.mubr.bf16.gmra.mrb[0].mxu0 %v534
      %v798 = vpop.f32.mrb[0].mxu0
      %v799 = vadd.f32 0.0, %v798
      %v800 = vpop.f32.mrb[0].mxu0
      %v801 = vpop.f32.mrb[0].mxu0
      %v802 = vadd.f32 0.0, %v801
      %v803 = vpop.f32.mrb[0].mxu0
      %804 = vmatprep.mubr.bf16.mxu0 0
      %805 = vmatmul.mubr.bf16.gmra.mrb[0].mxu0 %v537
      %v806 = vpop.f32.mrb[0].mxu0
      %v807 = vadd.f32 0.0, %v806
      %v808 = vpop.f32.mrb[0].mxu0
      %v809 = vpop.f32.mrb[0].mxu0
      %v810 = vadd.f32 0.0, %v809
      %v811 = vpop.f32.mrb[0].mxu0
      %812 = vmatprep.mubr.bf16.mxu0 0
      %813 = vmatmul.mubr.bf16.gmra.mrb[0].mxu0 %v540
      %v814 = vpop.f32.mrb[0].mxu0
      %v815 = vadd.f32 0.0, %v814
      %v816 = vpop.f32.mrb[0].mxu0
      %v817 = vpop.f32.mrb[0].mxu0
      %v818 = vadd.f32 0.0, %v817
      %v819 = vpop.f32.mrb[0].mxu0
      %820 = vmatprep.mubr.bf16.mxu0 0
      %821 = vmatmul.mubr.bf16.gmra.mrb[0].mxu0 %v543
      %v822 = vpop.f32.mrb[0].mxu0
      %v823 = vadd.f32 0.0, %v822
      %v824 = vpop.f32.mrb[0].mxu0
      %v825 = vpop.f32.mrb[0].mxu0
      %v826 = vadd.f32 0.0, %v825
      %v827 = vpop.f32.mrb[0].mxu0
      %828 = vmatprep.mubr.bf16.mxu0 0
      %829 = vmatmul.mubr.bf16.gmra.mrb[0].mxu0 %v546
      %v830 = vpop.f32.mrb[0].mxu0
      %v831 = vadd.f32 0.0, %v830
      %v832 = vpop.f32.mrb[0].mxu0
      %v833 = vpop.f32.mrb[0].mxu0
      %v834 = vadd.f32 0.0, %v833
      %v835 = vpop.f32.mrb[0].mxu0
      %836 = vdwg.mxu0
      %v837 = vpack.c.bf16 %v586, %v583
      %v838 = vpack.c.bf16 %v594, %v591
      %v839 = vpack.c.bf16 %v602, %v599
      %v840 = vpack.c.bf16 %v610, %v607
      %v841 = vpack.c.bf16 %v618, %v615
      %v842 = vpack.c.bf16 %v626, %v623
      %v843 = vpack.c.bf16 %v634, %v631
      %v844 = vpack.c.bf16 %v642, %v639
      %v845 = vpack.c.bf16 %v650, %v647
      %v846 = vpack.c.bf16 %v658, %v655
      %v847 = vpack.c.bf16 %v666, %v663
      %v848 = vpack.c.bf16 %v674, %v671
      %v849 = vpack.c.bf16 %v682, %v679
      %v850 = vpack.c.bf16 %v690, %v687
      %v851 = vpack.c.bf16 %v698, %v695
      %v852 = vpack.c.bf16 %v706, %v703
      %v853 = vpack.c.bf16 %v714, %v711
      %v854 = vpack.c.bf16 %v722, %v719
      %v855 = vpack.c.bf16 %v730, %v727
      %v856 = vpack.c.bf16 %v738, %v735
      %v857 = vpack.c.bf16 %v746, %v743
      %v858 = vpack.c.bf16 %v754, %v751
      %v859 = vpack.c.bf16 %v762, %v759
      %v860 = vpack.c.bf16 %v770, %v767
      %v861 = vpack.c.bf16 %v778, %v775
      %v862 = vpack.c.bf16 %v786, %v783
      %v863 = vpack.c.bf16 %v794, %v791
      %v864 = vpack.c.bf16 %v802, %v799
      %v865 = vpack.c.bf16 %v810, %v807
      %v866 = vpack.c.bf16 %v818, %v815
      %v867 = vpack.c.bf16 %v826, %v823
      %v868 = vpack.c.bf16 %v834, %v831
      %v901 = vunpack.c.l.b16 %v837
      %v902 = vunpack.c.h.b16 %v837
      %v903 = vunpack.c.l.b16 %v838
      %v904 = vunpack.c.h.b16 %v838
      %v905 = vunpack.c.l.b16 %v839
      %v906 = vunpack.c.h.b16 %v839
      %v907 = vunpack.c.l.b16 %v840
      %v908 = vunpack.c.h.b16 %v840
      %v909 = vunpack.c.l.b16 %v841
      %v910 = vunpack.c.h.b16 %v841
      %v911 = vunpack.c.l.b16 %v842
      %v912 = vunpack.c.h.b16 %v842
      %v913 = vunpack.c.l.b16 %v843
      %v914 = vunpack.c.h.b16 %v843
      %v915 = vunpack.c.l.b16 %v844
      %v916 = vunpack.c.h.b16 %v844
      %v917 = vunpack.c.l.b16 %v845
      %v918 = vunpack.c.h.b16 %v845
      %v919 = vunpack.c.l.b16 %v846
      %v920 = vunpack.c.h.b16 %v846
      %v921 = vunpack.c.l.b16 %v847
      %v922 = vunpack.c.h.b16 %v847
      %v923 = vunpack.c.l.b16 %v848
      %v924 = vunpack.c.h.b16 %v848
      %v925 = vunpack.c.l.b16 %v849
      %v926 = vunpack.c.h.b16 %v849
      %v927 = vunpack.c.l.b16 %v850
      %v928 = vunpack.c.h.b16 %v850
      %v929 = vunpack.c.l.b16 %v851
      %v930 = vunpack.c.h.b16 %v851
      %v931 = vunpack.c.l.b16 %v852
      %v932 = vunpack.c.h.b16 %v852
      %v933 = vunpack.c.l.b16 %v853
      %v934 = vunpack.c.h.b16 %v853
      %v935 = vunpack.c.l.b16 %v854
      %v936 = vunpack.c.h.b16 %v854
      %v937 = vunpack.c.l.b16 %v855
      %v938 = vunpack.c.h.b16 %v855
      %v939 = vunpack.c.l.b16 %v856
      %v940 = vunpack.c.h.b16 %v856
      %v941 = vunpack.c.l.b16 %v857
      %v942 = vunpack.c.h.b16 %v857
      %v943 = vunpack.c.l.b16 %v858
      %v944 = vunpack.c.h.b16 %v858
      %v945 = vunpack.c.l.b16 %v859
      %v946 = vunpack.c.h.b16 %v859
      %v947 = vunpack.c.l.b16 %v860
      %v948 = vunpack.c.h.b16 %v860
      %v949 = vunpack.c.l.b16 %v861
      %v950 = vunpack.c.h.b16 %v861
      %v951 = vunpack.c.l.b16 %v862
      %v952 = vunpack.c.h.b16 %v862
      %v953 = vunpack.c.l.b16 %v863
      %v954 = vunpack.c.h.b16 %v863
      %v955 = vunpack.c.l.b16 %v864
      %v956 = vunpack.c.h.b16 %v864
      %v957 = vunpack.c.l.b16 %v865
      %v958 = vunpack.c.h.b16 %v865
      %v959 = vunpack.c.l.b16 %v866
      %v960 = vunpack.c.h.b16 %v866
      %v961 = vunpack.c.l.b16 %v867
      %v962 = vunpack.c.h.b16 %v867
      %v963 = vunpack.c.l.b16 %v868
      %v964 = vunpack.c.h.b16 %v868
      %v965 = vpack.c.b16 %v901, %v901
      %v966 = vpack.c.b16 %v902, %v902
      %v967 = vpack.c.b16 %v903, %v903
      %v968 = vpack.c.b16 %v904, %v904
      %v969 = vpack.c.b16 %v905, %v905
      %v970 = vpack.c.b16 %v906, %v906
      %v971 = vpack.c.b16 %v907, %v907
      %v972 = vpack.c.b16 %v908, %v908
      %v973 = vpack.c.b16 %v909, %v909
      %v974 = vpack.c.b16 %v910, %v910
      %v975 = vpack.c.b16 %v911, %v911
      %v976 = vpack.c.b16 %v912, %v912
      %v977 = vpack.c.b16 %v913, %v913
      %v978 = vpack.c.b16 %v914, %v914
      %v979 = vpack.c.b16 %v915, %v915
      %v980 = vpack.c.b16 %v916, %v916
      %v981 = vpack.c.b16 %v917, %v917
      %v982 = vpack.c.b16 %v918, %v918
      %v983 = vpack.c.b16 %v919, %v919
      %v984 = vpack.c.b16 %v920, %v920
      %v985 = vpack.c.b16 %v921, %v921
      %v986 = vpack.c.b16 %v922, %v922
      %v987 = vpack.c.b16 %v923, %v923
      %v988 = vpack.c.b16 %v924, %v924
      %v989 = vpack.c.b16 %v925, %v925
      %v990 = vpack.c.b16 %v926, %v926
      %v991 = vpack.c.b16 %v927, %v927
      %v992 = vpack.c.b16 %v928, %v928
      %v993 = vpack.c.b16 %v929, %v929
      %v994 = vpack.c.b16 %v930, %v930
      %v995 = vpack.c.b16 %v931, %v931
      %v996 = vpack.c.b16 %v932, %v932
      %v997 = vpack.c.b16 %v933, %v933
      %v998 = vpack.c.b16 %v934, %v934
      %v999 = vpack.c.b16 %v935, %v935
      %v1000 = vpack.c.b16 %v936, %v936
      %v1001 = vpack.c.b16 %v937, %v937
      %v1002 = vpack.c.b16 %v938, %v938
      %v1003 = vpack.c.b16 %v939, %v939
      %v1004 = vpack.c.b16 %v940, %v940
      %v1005 = vpack.c.b16 %v941, %v941
      %v1006 = vpack.c.b16 %v942, %v942
      %v1007 = vpack.c.b16 %v943, %v943
      %v1008 = vpack.c.b16 %v944, %v944
      %v1009 = vpack.c.b16 %v945, %v945
      %v1010 = vpack.c.b16 %v946, %v946
      %v1011 = vpack.c.b16 %v947, %v947
      %v1012 = vpack.c.b16 %v948, %v948
      %v1013 = vpack.c.b16 %v949, %v949
      %v1014 = vpack.c.b16 %v950, %v950
      %v1015 = vpack.c.b16 %v951, %v951
      %v1016 = vpack.c.b16 %v952, %v952
      %v1017 = vpack.c.b16 %v953, %v953
      %v1018 = vpack.c.b16 %v954, %v954
      %v1019 = vpack.c.b16 %v955, %v955
      %v1020 = vpack.c.b16 %v956, %v956
      %v1021 = vpack.c.b16 %v957, %v957
      %v1022 = vpack.c.b16 %v958, %v958
      %v1023 = vpack.c.b16 %v959, %v959
      %v1024 = vpack.c.b16 %v960, %v960
      %v1025 = vpack.c.b16 %v961, %v961
      %v1026 = vpack.c.b16 %v962, %v962
      %v1027 = vpack.c.b16 %v963, %v963
      %v1028 = vpack.c.b16 %v964, %v964
      %1093 = vst [vmem:[%s210] sm:$0xf] %v965
      %1094 = vst [vmem:[%s210 + $0x4] sm:$0xf] %v966
      %1095 = vst [vmem:[%s210 + $0x8] sm:$0xf] %v967
      %1096 = vst [vmem:[%s210 + $0xc] sm:$0xf] %v968
      %1097 = vst [vmem:[%s210 + $0x10] sm:$0xf] %v969
      %1098 = vst [vmem:[%s210 + $0x14] sm:$0xf] %v970
      %1099 = vst [vmem:[%s210 + $0x18] sm:$0xf] %v971
      %1100 = vst [vmem:[%s210 + $0x1c] sm:$0xf] %v972
      %1101 = vst [vmem:[%s210 + $0x20] sm:$0xf] %v973
      %1102 = vst [vmem:[%s210 + $0x24] sm:$0xf] %v974
      %1103 = vst [vmem:[%s210 + $0x28] sm:$0xf] %v975
      %1104 = vst [vmem:[%s210 + $0x2c] sm:$0xf] %v976
      %1105 = vst [vmem:[%s210 + $0x30] sm:$0xf] %v977
      %1106 = vst [vmem:[%s210 + $0x34] sm:$0xf] %v978
      %1107 = vst [vmem:[%s210 + $0x38] sm:$0xf] %v979
      %1108 = vst [vmem:[%s210 + $0x3c] sm:$0xf] %v980
      %1109 = vst [vmem:[%s210 + $0x40] sm:$0xf] %v981
      %1110 = vst [vmem:[%s210 + $0x44] sm:$0xf] %v982
      %1111 = vst [vmem:[%s210 + $0x48] sm:$0xf] %v983
      %1112 = vst [vmem:[%s210 + $0x4c] sm:$0xf] %v984
      %1113 = vst [vmem:[%s210 + $0x50] sm:$0xf] %v985
      %1114 = vst [vmem:[%s210 + $0x54] sm:$0xf] %v986
      %1115 = vst [vmem:[%s210 + $0x58] sm:$0xf] %v987
      %1116 = vst [vmem:[%s210 + $0x5c] sm:$0xf] %v988
      %1117 = vst [vmem:[%s210 + $0x60] sm:$0xf] %v989
      %1118 = vst [vmem:[%s210 + $0x64] sm:$0xf] %v990
      %1119 = vst [vmem:[%s210 + $0x68] sm:$0xf] %v991
      %1120 = vst [vmem:[%s210 + $0x6c] sm:$0xf] %v992
      %1121 = vst [vmem:[%s210 + $0x70] sm:$0xf] %v993
      %1122 = vst [vmem:[%s210 + $0x74] sm:$0xf] %v994
      %1123 = vst [vmem:[%s210 + $0x78] sm:$0xf] %v995
      %1124 = vst [vmem:[%s210 + $0x7c] sm:$0xf] %v996
      %1125 = vst [vmem:[%s210 + $0x80] sm:$0xf] %v997
      %1126 = vst [vmem:[%s210 + $0x84] sm:$0xf] %v998
      %1127 = vst [vmem:[%s210 + $0x88] sm:$0xf] %v999
      %1128 = vst [vmem:[%s210 + $0x8c] sm:$0xf] %v1000
      %1129 = vst [vmem:[%s210 + $0x90] sm:$0xf] %v1001
      %1130 = vst [vmem:[%s210 + $0x94] sm:$0xf] %v1002
      %1131 = vst [vmem:[%s210 + $0x98] sm:$0xf] %v1003
      %1132 = vst [vmem:[%s210 + $0x9c] sm:$0xf] %v1004
      %1133 = vst [vmem:[%s210 + $0xa0] sm:$0xf] %v1005
      %1134 = vst [vmem:[%s210 + $0xa4] sm:$0xf] %v1006
      %1135 = vst [vmem:[%s210 + $0xa8] sm:$0xf] %v1007
      %1136 = vst [vmem:[%s210 + $0xac] sm:$0xf] %v1008
      %1137 = vst [vmem:[%s210 + $0xb0] sm:$0xf] %v1009
      %1138 = vst [vmem:[%s210 + $0xb4] sm:$0xf] %v1010
      %1139 = vst [vmem:[%s210 + $0xb8] sm:$0xf] %v1011
      %1140 = vst [vmem:[%s210 + $0xbc] sm:$0xf] %v1012
      %1141 = vst [vmem:[%s210 + $0xc0] sm:$0xf] %v1013
      %1142 = vst [vmem:[%s210 + $0xc4] sm:$0xf] %v1014
      %1143 = vst [vmem:[%s210 + $0xc8] sm:$0xf] %v1015
      %1144 = vst [vmem:[%s210 + $0xcc] sm:$0xf] %v1016
      %1145 = vst [vmem:[%s210 + $0xd0] sm:$0xf] %v1017
      %1146 = vst [vmem:[%s210 + $0xd4] sm:$0xf] %v1018
      %1147 = vst [vmem:[%s210 + $0xd8] sm:$0xf] %v1019
      %1148 = vst [vmem:[%s210 + $0xdc] sm:$0xf] %v1020
      %1149 = vst [vmem:[%s210 + $0xe0] sm:$0xf] %v1021
      %1150 = vst [vmem:[%s210 + $0xe4] sm:$0xf] %v1022
      %1151 = vst [vmem:[%s210 + $0xe8] sm:$0xf] %v1023
      %1152 = vst [vmem:[%s210 + $0xec] sm:$0xf] %v1024
      %1153 = vst [vmem:[%s210 + $0xf0] sm:$0xf] %v1025
      %1154 = vst [vmem:[%s210 + $0xf4] sm:$0xf] %v1026
      %1155 = vst [vmem:[%s210 + $0xf8] sm:$0xf] %v1027
      %1156 = vst [vmem:[%s210 + $0xfc] sm:$0xf] %v1028
      %v1157 = vadd.f32 %v583, %v586
      %v1158 = vadd.f32 %v1157, %v591
      %v1159 = vadd.f32 %v1158, %v594
      %v1160 = vadd.f32 %v1159, %v599
      %v1161 = vadd.f32 %v1160, %v602
      %v1162 = vadd.f32 %v1161, %v607
      %v1163 = vadd.f32 %v1162, %v610
      %v1164 = vadd.f32 %v1163, %v615
      %v1165 = vadd.f32 %v1164, %v618
      %v1166 = vadd.f32 %v1165, %v623
      %v1167 = vadd.f32 %v1166, %v626
      %v1168 = vadd.f32 %v1167, %v631
      %v1169 = vadd.f32 %v1168, %v634
      %v1170 = vadd.f32 %v1169, %v639
      %v1171 = vadd.f32 %v1170, %v642
      %v1172 = vadd.f32 %v1171, %v647
      %v1173 = vadd.f32 %v1172, %v650
      %v1174 = vadd.f32 %v1173, %v655
      %v1175 = vadd.f32 %v1174, %v658
      %v1176 = vadd.f32 %v1175, %v663
      %v1177 = vadd.f32 %v1176, %v666
      %v1178 = vadd.f32 %v1177, %v671
      %v1179 = vadd.f32 %v1178, %v674
      %v1180 = vadd.f32 %v1179, %v679
      %v1181 = vadd.f32 %v1180, %v682
      %v1182 = vadd.f32 %v1181, %v687
      %v1183 = vadd.f32 %v1182, %v690
      %v1184 = vadd.f32 %v1183, %v695
      %v1185 = vadd.f32 %v1184, %v698
      %v1186 = vadd.f32 %v1185, %v703
      %v1187 = vadd.f32 %v1186, %v706
      %v1188 = vadd.f32 %v1187, %v711
      %v1189 = vadd.f32 %v1188, %v714
      %v1190 = vadd.f32 %v1189, %v719
      %v1191 = vadd.f32 %v1190, %v722
      %v1192 = vadd.f32 %v1191, %v727
      %v1193 = vadd.f32 %v1192, %v730
      %v1194 = vadd.f32 %v1193, %v735
      %v1195 = vadd.f32 %v1194, %v738
      %v1196 = vadd.f32 %v1195, %v743
      %v1197 = vadd.f32 %v1196, %v746
      %v1198 = vadd.f32 %v1197, %v751
      %v1199 = vadd.f32 %v1198, %v754
      %v1200 = vadd.f32 %v1199, %v759
      %v1201 = vadd.f32 %v1200, %v762
      %v1202 = vadd.f32 %v1201, %v767
      %v1203 = vadd.f32 %v1202, %v770
      %v1204 = vadd.f32 %v1203, %v775
      %v1205 = vadd.f32 %v1204, %v778
      %v1206 = vadd.f32 %v1205, %v783
      %v1207 = vadd.f32 %v1206, %v786
      %v1208 = vadd.f32 %v1207, %v791
      %v1209 = vadd.f32 %v1208, %v794
      %v1210 = vadd.f32 %v1209, %v799
      %v1211 = vadd.f32 %v1210, %v802
      %v1212 = vadd.f32 %v1211, %v807
      %v1213 = vadd.f32 %v1212, %v810
      %v1214 = vadd.f32 %v1213, %v815
      %v1215 = vadd.f32 %v1214, %v818
      %v1216 = vadd.f32 %v1215, %v823
      %v1217 = vadd.f32 %v1216, %v826
      %v1218 = vadd.f32 %v1217, %v831
      %v1219 = vadd.f32 %v1218, %v834
      %v1220 = vrot.slane %v1219, 4
      %v1221 = vadd.f32 %v1219, %v1220
      %v1222 = vrot.slane %v1221, 2
      %v1223 = vadd.f32 %v1221, %v1222
      %v1224 = vrot.slane %v1223, 1
      %v1225 = vadd.f32 %v1223, %v1224
      %1226 = vst [vmem:[%s214] sm:$0x1] %v1225
      %v1227 = vmul.f32 %v583, %v583
      %v1228 = vmul.f32 %v586, %v586
      %v1229 = vmul.f32 %v591, %v591
      %v1230 = vmul.f32 %v594, %v594
      %v1231 = vmul.f32 %v599, %v599
      %v1232 = vmul.f32 %v602, %v602
      %v1233 = vmul.f32 %v607, %v607
      %v1234 = vmul.f32 %v610, %v610
      %v1235 = vmul.f32 %v615, %v615
      %v1236 = vmul.f32 %v618, %v618
      %v1237 = vmul.f32 %v623, %v623
      %v1238 = vmul.f32 %v626, %v626
      %v1239 = vmul.f32 %v631, %v631
      %v1240 = vmul.f32 %v634, %v634
      %v1241 = vmul.f32 %v639, %v639
      %v1242 = vmul.f32 %v642, %v642
      %v1243 = vmul.f32 %v647, %v647
      %v1244 = vmul.f32 %v650, %v650
      %v1245 = vmul.f32 %v655, %v655
      %v1246 = vmul.f32 %v658, %v658
      %v1247 = vmul.f32 %v663, %v663
      %v1248 = vmul.f32 %v666, %v666
      %v1249 = vmul.f32 %v671, %v671
      %v1250 = vmul.f32 %v674, %v674
      %v1251 = vmul.f32 %v679, %v679
      %v1252 = vmul.f32 %v682, %v682
      %v1253 = vmul.f32 %v687, %v687
      %v1254 = vmul.f32 %v690, %v690
      %v1255 = vmul.f32 %v695, %v695
      %v1256 = vmul.f32 %v698, %v698
      %v1257 = vmul.f32 %v703, %v703
      %v1258 = vmul.f32 %v706, %v706
      %v1259 = vmul.f32 %v711, %v711
      %v1260 = vmul.f32 %v714, %v714
      %v1261 = vmul.f32 %v719, %v719
      %v1262 = vmul.f32 %v722, %v722
      %v1263 = vmul.f32 %v727, %v727
      %v1264 = vmul.f32 %v730, %v730
      %v1265 = vmul.f32 %v735, %v735
      %v1266 = vmul.f32 %v738, %v738
      %v1267 = vmul.f32 %v743, %v743
      %v1268 = vmul.f32 %v746, %v746
      %v1269 = vmul.f32 %v751, %v751
      %v1270 = vmul.f32 %v754, %v754
      %v1271 = vmul.f32 %v759, %v759
      %v1272 = vmul.f32 %v762, %v762
      %v1273 = vmul.f32 %v767, %v767
      %v1274 = vmul.f32 %v770, %v770
      %v1275 = vmul.f32 %v775, %v775
      %v1276 = vmul.f32 %v778, %v778
      %v1277 = vmul.f32 %v783, %v783
      %v1278 = vmul.f32 %v786, %v786
      %v1279 = vmul.f32 %v791, %v791
      %v1280 = vmul.f32 %v794, %v794
      %v1281 = vmul.f32 %v799, %v799
      %v1282 = vmul.f32 %v802, %v802
      %v1283 = vmul.f32 %v807, %v807
      %v1284 = vmul.f32 %v810, %v810
      %v1285 = vmul.f32 %v815, %v815
      %v1286 = vmul.f32 %v818, %v818
      %v1287 = vmul.f32 %v823, %v823
      %v1288 = vmul.f32 %v826, %v826
      %v1289 = vmul.f32 %v831, %v831
      %v1290 = vmul.f32 %v834, %v834
      %v1291 = vadd.f32 %v1227, %v1228
      %v1292 = vadd.f32 %v1291, %v1229
      %v1293 = vadd.f32 %v1292, %v1230
      %v1294 = vadd.f32 %v1293, %v1231
      %v1295 = vadd.f32 %v1294, %v1232
      %v1296 = vadd.f32 %v1295, %v1233
      %v1297 = vadd.f32 %v1296, %v1234
      %v1298 = vadd.f32 %v1297, %v1235
      %v1299 = vadd.f32 %v1298, %v1236
      %v1300 = vadd.f32 %v1299, %v1237
      %v1301 = vadd.f32 %v1300, %v1238
      %v1302 = vadd.f32 %v1301, %v1239
      %v1303 = vadd.f32 %v1302, %v1240
      %v1304 = vadd.f32 %v1303, %v1241
      %v1305 = vadd.f32 %v1304, %v1242
      %v1306 = vadd.f32 %v1305, %v1243
      %v1307 = vadd.f32 %v1306, %v1244
      %v1308 = vadd.f32 %v1307, %v1245
      %v1309 = vadd.f32 %v1308, %v1246
      %v1310 = vadd.f32 %v1309, %v1247
      %v1311 = vadd.f32 %v1310, %v1248
      %v1312 = vadd.f32 %v1311, %v1249
      %v1313 = vadd.f32 %v1312, %v1250
      %v1314 = vadd.f32 %v1313, %v1251
      %v1315 = vadd.f32 %v1314, %v1252
      %v1316 = vadd.f32 %v1315, %v1253
      %v1317 = vadd.f32 %v1316, %v1254
      %v1318 = vadd.f32 %v1317, %v1255
      %v1319 = vadd.f32 %v1318, %v1256
      %v1320 = vadd.f32 %v1319, %v1257
      %v1321 = vadd.f32 %v1320, %v1258
      %v1322 = vadd.f32 %v1321, %v1259
      %v1323 = vadd.f32 %v1322, %v1260
      %v1324 = vadd.f32 %v1323, %v1261
      %v1325 = vadd.f32 %v1324, %v1262
      %v1326 = vadd.f32 %v1325, %v1263
      %v1327 = vadd.f32 %v1326, %v1264
      %v1328 = vadd.f32 %v1327, %v1265
      %v1329 = vadd.f32 %v1328, %v1266
      %v1330 = vadd.f32 %v1329, %v1267
      %v1331 = vadd.f32 %v1330, %v1268
      %v1332 = vadd.f32 %v1331, %v1269
      %v1333 = vadd.f32 %v1332, %v1270
      %v1334 = vadd.f32 %v1333, %v1271
      %v1335 = vadd.f32 %v1334, %v1272
      %v1336 = vadd.f32 %v1335, %v1273
      %v1337 = vadd.f32 %v1336, %v1274
      %v1338 = vadd.f32 %v1337, %v1275
      %v1339 = vadd.f32 %v1338, %v1276
      %v1340 = vadd.f32 %v1339, %v1277
      %v1341 = vadd.f32 %v1340, %v1278
      %v1342 = vadd.f32 %v1341, %v1279
      %v1343 = vadd.f32 %v1342, %v1280
      %v1344 = vadd.f32 %v1343, %v1281
      %v1345 = vadd.f32 %v1344, %v1282
      %v1346 = vadd.f32 %v1345, %v1283
      %v1347 = vadd.f32 %v1346, %v1284
      %v1348 = vadd.f32 %v1347, %v1285
      %v1349 = vadd.f32 %v1348, %v1286
      %v1350 = vadd.f32 %v1349, %v1287
      %v1351 = vadd.f32 %v1350, %v1288
      %v1352 = vadd.f32 %v1351, %v1289
      %v1353 = vadd.f32 %v1352, %v1290
      %v1354 = vrot.slane %v1353, 4
      %v1355 = vadd.f32 %v1353, %v1354
      %v1356 = vrot.slane %v1355, 2
      %v1357 = vadd.f32 %v1355, %v1356
      %v1358 = vrot.slane %v1357, 1
      %v1359 = vadd.f32 %v1357, %v1358
      %1360 = vst [vmem:[%s217] sm:$0x1] %v1359
      %s1361 = smul.u32 64, %s16
      %p1362 = scmp.lt.s32.totalorder %s1361, 127
      %s1363 = scalar_select %p1362, %s1361, 127
      %s1364 = smul.addr %s1363, 4
      %s1365 = scalar_lea.vmem %s2, %s1364
      %p1366 = scmp.lt.s32.totalorder %s16, 1
      %s1367 = scalar_select %p1366, %s16, 1
      %s1368 = scalar_lea.vmem %s3, %s1367
      %p1369 = scmp.lt.s32.totalorder %s16, 1
      %s1370 = scalar_select %p1369, %s16, 1
      %s1371 = scalar_lea.vmem %s4, %s1370
      // Predicated region
      $region29: #{deconv_block_forward.2} parent=27 // pred_check
        %p1372 = pneg %p81
      $region30: #{deconv_block_forward.2} parent=27 // pred_check_branch
        %1374 = sbr.rel (%p1372) target = $region32
      $region31: #{deconv_block_forward.2} parent=27 // pred_region
        %s1375 = smul.u32 64, %s16
      $region32: #{deconv_block_forward.2} parent=27 // pred_fallthru
        _
      // Predicated region
      $region33: #{deconv_block_forward.2} parent=27 // pred_check
        %p1376 = pneg %p107
      $region34: #{deconv_block_forward.2} parent=27 // pred_check_branch
        %1378 = sbr.rel (%p1376) target = $region36
      $region35: #{deconv_block_forward.2} parent=27 // pred_region
        _
      $region36: #{deconv_block_forward.2} parent=27 // pred_fallthru
        _
      // Predicated region
      $region37: #{deconv_block_forward.2} parent=27 // pred_check
        %p1379 = pneg %p133
      $region38: #{deconv_block_forward.2} parent=27 // pred_check_branch
        %1381 = sbr.rel (%p1379) target = $region40
      $region39: #{deconv_block_forward.2} parent=27 // pred_region
        _
      $region40: #{deconv_block_forward.2} parent=27 // pred_fallthru
        _
    $region28: #{deconv_block_forward.2} parent=5 // pred_fallthru
      _
    %p1382 = scmp.le.s32.totalorder 2, %s11
    // Predicated region
    $region41: #{deconv_block_forward.2} parent=5 // pred_check
      %p1383 = pneg %p1382
    $region42: #{deconv_block_forward.2} parent=5 // pred_check_branch
      %1385 = sbr.rel (%p1383) target = $region44
    $region43: #{deconv_block_forward.2} parent=5 // pred_region
      %s1386 = ssub.s32 %s11, 2
      // Predicated region
      $region45: #{deconv_block_forward.2} parent=43 // pred_check
        %p1387 = pneg %p87
      $region46: #{deconv_block_forward.2} parent=43 // pred_check_branch
        %1389 = sbr.rel (%p1387) target = $region48
      $region47: #{deconv_block_forward.2} parent=43 // pred_region
        %s1390 = smul.u32 64, %s17
        %p1391 = scmp.lt.s32.totalorder %s1390, 127
        %s1392 = scalar_select %p1391, %s1390, 127
        %s1393 = smul.addr %s1392, 4
        %s1394 = scalar_lea.vmem %s2, %s1393
      $region48: #{deconv_block_forward.2} parent=43 // pred_fallthru
        _
      // Predicated region
      $region49: #{deconv_block_forward.2} parent=43 // pred_check
        %p1395 = pneg %p113
      $region50: #{deconv_block_forward.2} parent=43 // pred_check_branch
        %1397 = sbr.rel (%p1395) target = $region52
      $region51: #{deconv_block_forward.2} parent=43 // pred_region
        %p1398 = scmp.lt.s32.totalorder %s17, 1
        %s1399 = scalar_select %p1398, %s17, 1
        %s1400 = scalar_lea.vmem %s3, %s1399
      $region52: #{deconv_block_forward.2} parent=43 // pred_fallthru
        _
      // Predicated region
      $region53: #{deconv_block_forward.2} parent=43 // pred_check
        %p1401 = pneg %p139
      $region54: #{deconv_block_forward.2} parent=43 // pred_check_branch
        %1403 = sbr.rel (%p1401) target = $region56
      $region55: #{deconv_block_forward.2} parent=43 // pred_region
        %p1404 = scmp.lt.s32.totalorder %s17, 1
        %s1405 = scalar_select %p1404, %s17, 1
        %s1406 = scalar_lea.vmem %s4, %s1405
      $region56: #{deconv_block_forward.2} parent=43 // pred_fallthru
        _
    $region44: #{deconv_block_forward.2} parent=5 // pred_fallthru
      _
  $region6: #{deconv_block_forward.2} parent=0 // loop_footer
    %s15 = sadd.s32 1, %s11
  $region7: #{deconv_block_forward.2} parent=0 // loop_footer_branch
    %10 = sbr.rel target = $region3
  $region8: #{deconv_block_forward.2} parent=0 // loop_exit
    _

// kernel: deconv_block_forward.3
$region0: #{deconv_block_forward.3}
  #allocation0 [shape = 'u32[]', space=smem, size = 0x4, offset = 0x4, fixed_abs, tag = 'smem constant byte address 0x4 - core index']
  #allocation1 [shape = 'u32[144,128]{1,0:T(1,128)}', space=vmem, size = 0x12000, scoped, tag = 'internal scratch']
  %s0 = inlined_call_operand.vmem [shape: bf16[1024,128], index: 0, kind: input, shape index: {}]
  %s1 = inlined_call_operand.vmem [shape: f32[1,128], index: 1, kind: input, shape index: {}]
  %s2 = inlined_call_operand.vmem [shape: f32[1,128], index: 2, kind: input, shape index: {}]
  %s3 = inlined_call_operand.vmem [shape: f32[1024,128], index: 3, kind: output, shape index: {}]
  %s4 = sld [smem:[#allocation0]]
  $region45: #{deconv_block_forward.3} parent=0
    _
  %s6 = ssub.s32 1, %s4
  %s7 = scalar_select 0, %s6, %s4
  loop: start=0, step=1, limit=4
  $region2: #{deconv_block_forward.3} parent=0 // loop_pre_header
    _
  $region3: #{deconv_block_forward.3} parent=0 // loop_header
    %s9 = sphi 0, %s13
    %p10 = scmp.ge.s32.totalorder %s9, 4
    %s19 = sphi 0, %s21
    %s22 = sphi 0, %s19
    %s23 = sphi 0, %s22
    %s39 = sphi 0, %s23
    %s43 = sphi 0, %s43
    %s45 = sphi 0, %s43
    %s46 = sphi 0, %s45
    %s60 = sphi 0, %s46
    %s64 = sphi 0, %s64
    %s66 = sphi 0, %s64
    %s67 = sphi 0, %s66
    %s81 = sphi 0, %s67
    %s87 = sphi 0, %s89
    %s90 = sphi 0, %s87
    %s91 = sphi 0, %s90
    %s107 = sphi 0, %s91
  $region4: #{deconv_block_forward.3} parent=0 // loop_header_branch
    %12 = sbr.rel (%p10) target = $region8
  $region5: #{deconv_block_forward.3} parent=0 // loop_body
    %s14 = ssub.s32 %s9, 1
    %s15 = ssub.s32 %s9, 2
    %s16 = sadd.s32 %s9, 1
    %s17 = ssub.s32 %s9, %s16
    %p18 = scmp.eq.s32.totalorder %s17, 0
    %s20 = sadd.s32 %s19, 1
    %s21 = scalar_select %p18, %s19, %s20
    %p24 = pneg %p18
    %p25 = scmp.eq.s32.totalorder %s9, 1
    %p26 = por %p24, %p25
    %p27 = scmp.ne.s32.totalorder %s19, %s22
    %p28 = scmp.eq.s32.totalorder %s9, 0
    %p29 = por %p27, %p28
    %p30 = scmp.ne.s32.totalorder %s19, %s22
    %p31 = scmp.eq.s32.totalorder %s14, 1
    %p32 = por %p30, %p31
    %p33 = scmp.ne.s32.totalorder %s22, %s23
    %p34 = scmp.eq.s32.totalorder %s14, 0
    %p35 = por %p33, %p34
    %p36 = scmp.ne.s32.totalorder %s22, %s23
    %p37 = scmp.eq.s32.totalorder %s15, 1
    %p38 = por %p36, %p37
    %p40 = scmp.ne.s32.totalorder %s23, %s39
    %p41 = scmp.eq.s32.totalorder %s15, 0
    %p42 = por %p40, %p41
    %s44 = sadd.s32 %s43, 1
    %p47 = scmp.eq.s32.totalorder %s9, 1
    %p48 = scmp.ne.s32.totalorder %s43, %s45
    %p49 = scmp.eq.s32.totalorder %s9, 0
    %p50 = por %p48, %p49
    %p51 = scmp.ne.s32.totalorder %s43, %s45
    %p52 = scmp.eq.s32.totalorder %s14, 1
    %p53 = por %p51, %p52
    %p54 = scmp.ne.s32.totalorder %s45, %s46
    %p55 = scmp.eq.s32.totalorder %s14, 0
    %p56 = por %p54, %p55
    %p57 = scmp.ne.s32.totalorder %s45, %s46
    %p58 = scmp.eq.s32.totalorder %s15, 1
    %p59 = por %p57, %p58
    %p61 = scmp.ne.s32.totalorder %s46, %s60
    %p62 = scmp.eq.s32.totalorder %s15, 0
    %p63 = por %p61, %p62
    %s65 = sadd.s32 %s64, 1
    %p68 = scmp.eq.s32.totalorder %s9, 1
    %p69 = scmp.ne.s32.totalorder %s64, %s66
    %p70 = scmp.eq.s32.totalorder %s9, 0
    %p71 = por %p69, %p70
    %p72 = scmp.ne.s32.totalorder %s64, %s66
    %p73 = scmp.eq.s32.totalorder %s14, 1
    %p74 = por %p72, %p73
    %p75 = scmp.ne.s32.totalorder %s66, %s67
    %p76 = scmp.eq.s32.totalorder %s14, 0
    %p77 = por %p75, %p76
    %p78 = scmp.ne.s32.totalorder %s66, %s67
    %p79 = scmp.eq.s32.totalorder %s15, 1
    %p80 = por %p78, %p79
    %p82 = scmp.ne.s32.totalorder %s67, %s81
    %p83 = scmp.eq.s32.totalorder %s15, 0
    %p84 = por %p82, %p83
    %s85 = ssub.s32 %s9, %s16
    %p86 = scmp.eq.s32.totalorder %s85, 0
    %s88 = sadd.s32 %s87, 1
    %s89 = scalar_select %p86, %s87, %s88
    %p92 = pneg %p86
    %p93 = scmp.eq.s32.totalorder %s9, 1
    %p94 = por %p92, %p93
    %p95 = scmp.ne.s32.totalorder %s87, %s90
    %p96 = scmp.eq.s32.totalorder %s9, 0
    %p97 = por %p95, %p96
    %p98 = scmp.ne.s32.totalorder %s87, %s90
    %p99 = scmp.eq.s32.totalorder %s14, 1
    %p100 = por %p98, %p99
    %p101 = scmp.ne.s32.totalorder %s90, %s91
    %p102 = scmp.eq.s32.totalorder %s14, 0
    %p103 = por %p101, %p102
    %p104 = scmp.ne.s32.totalorder %s90, %s91
    %p105 = scmp.eq.s32.totalorder %s15, 1
    %p106 = por %p104, %p105
    %p108 = scmp.ne.s32.totalorder %s91, %s107
    %p109 = scmp.eq.s32.totalorder %s15, 0
    %p110 = por %p108, %p109
    %p111 = scmp.le.s32.totalorder 1, %s9
    %p112 = scmp.lt.s32.totalorder %s9, 3
    %p113 = pnand %p111, %p112
    %p114 = pneg %p113
    // Predicated region
    $region9: #{deconv_block_forward.3} parent=5 // pred_check
      _
    $region10: #{deconv_block_forward.3} parent=5 // pred_check_branch
      %116 = sbr.rel (%p113) target = $region12
    $region11: #{deconv_block_forward.3} parent=5 // pred_region
      %s117 = ssub.s32 %s9, 1
      // Predicated region
      $region13: #{deconv_block_forward.3} parent=11 // pred_check
        %p118 = pneg %p56
      $region14: #{deconv_block_forward.3} parent=11 // pred_check_branch
        %120 = sbr.rel (%p118) target = $region16
      $region15: #{deconv_block_forward.3} parent=11 // pred_region
        _
      $region16: #{deconv_block_forward.3} parent=11 // pred_fallthru
        _
      // Predicated region
      $region17: #{deconv_block_forward.3} parent=11 // pred_check
        %p121 = pneg %p77
      $region18: #{deconv_block_forward.3} parent=11 // pred_check_branch
        %123 = sbr.rel (%p121) target = $region20
      $region19: #{deconv_block_forward.3} parent=11 // pred_region
        _
      $region20: #{deconv_block_forward.3} parent=11 // pred_fallthru
        _
    $region12: #{deconv_block_forward.3} parent=5 // pred_fallthru
      _
    %p124 = scmp.lt.s32.totalorder %s9, 2
    // Predicated region
    $region21: #{deconv_block_forward.3} parent=5 // pred_check
      %p125 = pneg %p124
    $region22: #{deconv_block_forward.3} parent=5 // pred_check_branch
      %127 = sbr.rel (%p125) target = $region24
    $region23: #{deconv_block_forward.3} parent=5 // pred_region
      // Predicated region
      $region25: #{deconv_block_forward.3} parent=23 // pred_check
        %p128 = pneg %p29
      $region26: #{deconv_block_forward.3} parent=23 // pred_check_branch
        %130 = sbr.rel (%p128) target = $region28
      $region27: #{deconv_block_forward.3} parent=23 // pred_region
        %s131 = smul.u32 64, %s9
        %p132 = scmp.lt.s32.totalorder %s131, 127
        %s133 = scalar_select %p132, %s131, 127
        %s134 = smul.addr %s133, 4
        %s135 = scalar_lea.vmem %s0, %s134
        %s136 = smul.u32 64, %s9
      $region28: #{deconv_block_forward.3} parent=23 // pred_fallthru
        _
    $region24: #{deconv_block_forward.3} parent=5 // pred_fallthru
      _
    %p137 = scmp.le.s32.totalorder 1, %s9
    %p138 = scmp.lt.s32.totalorder %s9, 3
    %p139 = pnand %p137, %p138
    %p140 = pneg %p139
    // Predicated region
    $region29: #{deconv_block_forward.3} parent=5 // pred_check
      _
    $region30: #{deconv_block_forward.3} parent=5 // pred_check_branch
      %142 = sbr.rel (%p139) target = $region32
    $region31: #{deconv_block_forward.3} parent=5 // pred_region
      %s143 = ssub.s32 %s9, 1
      %s144 = smul.u32 64, %s14
      %p145 = scmp.lt.s32.totalorder %s144, 127
      %s146 = scalar_select %p145, %s144, 127
      %s147 = smul.addr %s146, 4
      %s148 = scalar_lea.vmem %s0, %s147
      %p149 = pneg %p35
      %p150 = pneg %p32
      %p151 = pneg %p56
      %p152 = pneg %p53
      %p153 = pneg %p77
      %p154 = pneg %p74
      %p155 = pneg %p103
      %p156 = pneg %p100
      %s157 = smul.u32 64, %s14
      %p158 = scmp.lt.s32.totalorder %s157, 127
      %s159 = scalar_select %p158, %s157, 127
      %s160 = smul.addr %s159, 8
      %s161 = scalar_lea.vmem %s3, %s160
      %s162 = smul.u32 64, %s14
      %p163 = scmp.lt.s32.totalorder %s162, 127
      %s164 = scalar_select %p163, %s162, 127
      %s165 = smul.addr %s164, 4
      %s166 = scalar_lea.vmem %s0, %s165
      %s167 = smul.u32 64, %s14
      %s168 = smul.u32 64, %s14
      %p169 = scmp.lt.s32.totalorder %s168, 127
      %s170 = scalar_select %p169, %s168, 127
      %s171 = smul.addr %s170, 8
      %s172 = scalar_lea.vmem %s3, %s171
      %s173 = smul.u32 64, %s14
      %v174 = vld [vmem:[%s166] sm:$0xf]
      %v175 = vld [vmem:[%s166 + $0x4] sm:$0xf]
      %v176 = vld [vmem:[%s166 + $0x8] sm:$0xf]
      %v177 = vld [vmem:[%s166 + $0xc] sm:$0xf]
      %v178 = vld [vmem:[%s166 + $0x10] sm:$0xf]
      %v179 = vld [vmem:[%s166 + $0x14] sm:$0xf]
      %v180 = vld [vmem:[%s166 + $0x18] sm:$0xf]
      %v181 = vld [vmem:[%s166 + $0x1c] sm:$0xf]
      %v182 = vld [vmem:[%s166 + $0x20] sm:$0xf]
      %v183 = vld [vmem:[%s166 + $0x24] sm:$0xf]
      %v184 = vld [vmem:[%s166 + $0x28] sm:$0xf]
      %v185 = vld [vmem:[%s166 + $0x2c] sm:$0xf]
      %v186 = vld [vmem:[%s166 + $0x30] sm:$0xf]
      %v187 = vld [vmem:[%s166 + $0x34] sm:$0xf]
      %v188 = vld [vmem:[%s166 + $0x38] sm:$0xf]
      %v189 = vld [vmem:[%s166 + $0x3c] sm:$0xf]
      %v190 = vld [vmem:[%s166 + $0x40] sm:$0xf]
      %v191 = vld [vmem:[%s166 + $0x44] sm:$0xf]
      %v192 = vld [vmem:[%s166 + $0x48] sm:$0xf]
      %v193 = vld [vmem:[%s166 + $0x4c] sm:$0xf]
      %v194 = vld [vmem:[%s166 + $0x50] sm:$0xf]
      %v195 = vld [vmem:[%s166 + $0x54] sm:$0xf]
      %v196 = vld [vmem:[%s166 + $0x58] sm:$0xf]
      %v197 = vld [vmem:[%s166 + $0x5c] sm:$0xf]
      %v198 = vld [vmem:[%s166 + $0x60] sm:$0xf]
      %v199 = vld [vmem:[%s166 + $0x64] sm:$0xf]
      %v200 = vld [vmem:[%s166 + $0x68] sm:$0xf]
      %v201 = vld [vmem:[%s166 + $0x6c] sm:$0xf]
      %v202 = vld [vmem:[%s166 + $0x70] sm:$0xf]
      %v203 = vld [vmem:[%s166 + $0x74] sm:$0xf]
      %v204 = vld [vmem:[%s166 + $0x78] sm:$0xf]
      %v205 = vld [vmem:[%s166 + $0x7c] sm:$0xf]
      %v206 = vld [vmem:[%s166 + $0x80] sm:$0xf]
      %v207 = vld [vmem:[%s166 + $0x84] sm:$0xf]
      %v208 = vld [vmem:[%s166 + $0x88] sm:$0xf]
      %v209 = vld [vmem:[%s166 + $0x8c] sm:$0xf]
      %v210 = vld [vmem:[%s166 + $0x90] sm:$0xf]
      %v211 = vld [vmem:[%s166 + $0x94] sm:$0xf]
      %v212 = vld [vmem:[%s166 + $0x98] sm:$0xf]
      %v213 = vld [vmem:[%s166 + $0x9c] sm:$0xf]
      %v214 = vld [vmem:[%s166 + $0xa0] sm:$0xf]
      %v215 = vld [vmem:[%s166 + $0xa4] sm:$0xf]
      %v216 = vld [vmem:[%s166 + $0xa8] sm:$0xf]
      %v217 = vld [vmem:[%s166 + $0xac] sm:$0xf]
      %v218 = vld [vmem:[%s166 + $0xb0] sm:$0xf]
      %v219 = vld [vmem:[%s166 + $0xb4] sm:$0xf]
      %v220 = vld [vmem:[%s166 + $0xb8] sm:$0xf]
      %v221 = vld [vmem:[%s166 + $0xbc] sm:$0xf]
      %v222 = vld [vmem:[%s166 + $0xc0] sm:$0xf]
      %v223 = vld [vmem:[%s166 + $0xc4] sm:$0xf]
      %v224 = vld [vmem:[%s166 + $0xc8] sm:$0xf]
      %v225 = vld [vmem:[%s166 + $0xcc] sm:$0xf]
      %v226 = vld [vmem:[%s166 + $0xd0] sm:$0xf]
      %v227 = vld [vmem:[%s166 + $0xd4] sm:$0xf]
      %v228 = vld [vmem:[%s166 + $0xd8] sm:$0xf]
      %v229 = vld [vmem:[%s166 + $0xdc] sm:$0xf]
      %v230 = vld [vmem:[%s166 + $0xe0] sm:$0xf]
      %v231 = vld [vmem:[%s166 + $0xe4] sm:$0xf]
      %v232 = vld [vmem:[%s166 + $0xe8] sm:$0xf]
      %v233 = vld [vmem:[%s166 + $0xec] sm:$0xf]
      %v234 = vld [vmem:[%s166 + $0xf0] sm:$0xf]
      %v235 = vld [vmem:[%s166 + $0xf4] sm:$0xf]
      %v236 = vld [vmem:[%s166 + $0xf8] sm:$0xf]
      %v237 = vld [vmem:[%s166 + $0xfc] sm:$0xf]
      %v238 = vunpack.c.l.bf16 %v174
      %v239 = vunpack.c.l.bf16 %v175
      %v240 = vunpack.c.l.bf16 %v176
      %v241 = vunpack.c.l.bf16 %v177
      %v242 = vunpack.c.l.bf16 %v178
      %v243 = vunpack.c.l.bf16 %v179
      %v244 = vunpack.c.l.bf16 %v180
      %v245 = vunpack.c.l.bf16 %v181
      %v246 = vunpack.c.l.bf16 %v182
      %v247 = vunpack.c.l.bf16 %v183
      %v248 = vunpack.c.l.bf16 %v184
      %v249 = vunpack.c.l.bf16 %v185
      %v250 = vunpack.c.l.bf16 %v186
      %v251 = vunpack.c.l.bf16 %v187
      %v252 = vunpack.c.l.bf16 %v188
      %v253 = vunpack.c.l.bf16 %v189
      %v254 = vunpack.c.l.bf16 %v190
      %v255 = vunpack.c.l.bf16 %v191
      %v256 = vunpack.c.l.bf16 %v192
      %v257 = vunpack.c.l.bf16 %v193
      %v258 = vunpack.c.l.bf16 %v194
      %v259 = vunpack.c.l.bf16 %v195
      %v260 = vunpack.c.l.bf16 %v196
      %v261 = vunpack.c.l.bf16 %v197
      %v262 = vunpack.c.l.bf16 %v198
      %v263 = vunpack.c.l.bf16 %v199
      %v264 = vunpack.c.l.bf16 %v200
      %v265 = vunpack.c.l.bf16 %v201
      %v266 = vunpack.c.l.bf16 %v202
      %v267 = vunpack.c.l.bf16 %v203
      %v268 = vunpack.c.l.bf16 %v204
      %v269 = vunpack.c.l.bf16 %v205
      %v270 = vunpack.c.l.bf16 %v206
      %v271 = vunpack.c.l.bf16 %v207
      %v272 = vunpack.c.l.bf16 %v208
      %v273 = vunpack.c.l.bf16 %v209
      %v274 = vunpack.c.l.bf16 %v210
      %v275 = vunpack.c.l.bf16 %v211
      %v276 = vunpack.c.l.bf16 %v212
      %v277 = vunpack.c.l.bf16 %v213
      %v278 = vunpack.c.l.bf16 %v214
      %v279 = vunpack.c.l.bf16 %v215
      %v280 = vunpack.c.l.bf16 %v216
      %v281 = vunpack.c.l.bf16 %v217
      %v282 = vunpack.c.l.bf16 %v218
      %v283 = vunpack.c.l.bf16 %v219
      %v284 = vunpack.c.l.bf16 %v220
      %v285 = vunpack.c.l.bf16 %v221
      %v286 = vunpack.c.l.bf16 %v222
      %v287 = vunpack.c.l.bf16 %v223
      %v288 = vunpack.c.l.bf16 %v224
      %v289 = vunpack.c.l.bf16 %v225
      %v290 = vunpack.c.l.bf16 %v226
      %v291 = vunpack.c.l.bf16 %v227
      %v292 = vunpack.c.l.bf16 %v228
      %v293 = vunpack.c.l.bf16 %v229
      %v294 = vunpack.c.l.bf16 %v230
      %v295 = vunpack.c.l.bf16 %v231
      %v296 = vunpack.c.l.bf16 %v232
      %v297 = vunpack.c.l.bf16 %v233
      %v298 = vunpack.c.l.bf16 %v234
      %v299 = vunpack.c.l.bf16 %v235
      %v300 = vunpack.c.l.bf16 %v236
      %v301 = vunpack.c.l.bf16 %v237
      %v302 = vld [vmem:[%s1] sm:$0x1]
      %v304 = vlaneseq
      %v305 = vshrl.u32 %v304, 7
      %v306 = vsub.s32 0, %v305
      %v307 = vrot.slane %v302, %v306
      %v309 = vmul.f32 %v238, %v307
      %v310 = vmul.f32 %v239, %v307
      %v311 = vmul.f32 %v240, %v307
      %v312 = vmul.f32 %v241, %v307
      %v313 = vmul.f32 %v242, %v307
      %v314 = vmul.f32 %v243, %v307
      %v315 = vmul.f32 %v244, %v307
      %v316 = vmul.f32 %v245, %v307
      %v317 = vmul.f32 %v246, %v307
      %v318 = vmul.f32 %v247, %v307
      %v319 = vmul.f32 %v248, %v307
      %v320 = vmul.f32 %v249, %v307
      %v321 = vmul.f32 %v250, %v307
      %v322 = vmul.f32 %v251, %v307
      %v323 = vmul.f32 %v252, %v307
      %v324 = vmul.f32 %v253, %v307
      %v325 = vmul.f32 %v254, %v307
      %v326 = vmul.f32 %v255, %v307
      %v327 = vmul.f32 %v256, %v307
      %v328 = vmul.f32 %v257, %v307
      %v329 = vmul.f32 %v258, %v307
      %v330 = vmul.f32 %v259, %v307
      %v331 = vmul.f32 %v260, %v307
      %v332 = vmul.f32 %v261, %v307
      %v333 = vmul.f32 %v262, %v307
      %v334 = vmul.f32 %v263, %v307
      %v335 = vmul.f32 %v264, %v307
      %v336 = vmul.f32 %v265, %v307
      %v337 = vmul.f32 %v266, %v307
      %v338 = vmul.f32 %v267, %v307
      %v339 = vmul.f32 %v268, %v307
      %v340 = vmul.f32 %v269, %v307
      %v341 = vmul.f32 %v270, %v307
      %v342 = vmul.f32 %v271, %v307
      %v343 = vmul.f32 %v272, %v307
      %v344 = vmul.f32 %v273, %v307
      %v345 = vmul.f32 %v274, %v307
      %v346 = vmul.f32 %v275, %v307
      %v347 = vmul.f32 %v276, %v307
      %v348 = vmul.f32 %v277, %v307
      %v349 = vmul.f32 %v278, %v307
      %v350 = vmul.f32 %v279, %v307
      %v351 = vmul.f32 %v280, %v307
      %v352 = vmul.f32 %v281, %v307
      %v353 = vmul.f32 %v282, %v307
      %v354 = vmul.f32 %v283, %v307
      %v355 = vmul.f32 %v284, %v307
      %v356 = vmul.f32 %v285, %v307
      %v357 = vmul.f32 %v286, %v307
      %v358 = vmul.f32 %v287, %v307
      %v359 = vmul.f32 %v288, %v307
      %v360 = vmul.f32 %v289, %v307
      %v361 = vmul.f32 %v290, %v307
      %v362 = vmul.f32 %v291, %v307
      %v363 = vmul.f32 %v292, %v307
      %v364 = vmul.f32 %v293, %v307
      %v365 = vmul.f32 %v294, %v307
      %v366 = vmul.f32 %v295, %v307
      %v367 = vmul.f32 %v296, %v307
      %v368 = vmul.f32 %v297, %v307
      %v369 = vmul.f32 %v298, %v307
      %v370 = vmul.f32 %v299, %v307
      %v371 = vmul.f32 %v300, %v307
      %v372 = vmul.f32 %v301, %v307
      %v373 = vld [vmem:[%s2] sm:$0x1]
      %v375 = vlaneseq
      %v376 = vshrl.u32 %v375, 7
      %v377 = vsub.s32 0, %v376
      %v378 = vrot.slane %v373, %v377
      %v380 = vadd.f32 %v309, %v378
      %v381 = vadd.f32 %v310, %v378
      %v382 = vadd.f32 %v311, %v378
      %v383 = vadd.f32 %v312, %v378
      %v384 = vadd.f32 %v313, %v378
      %v385 = vadd.f32 %v314, %v378
      %v386 = vadd.f32 %v315, %v378
      %v387 = vadd.f32 %v316, %v378
      %v388 = vadd.f32 %v317, %v378
      %v389 = vadd.f32 %v318, %v378
      %v390 = vadd.f32 %v319, %v378
      %v391 = vadd.f32 %v320, %v378
      %v392 = vadd.f32 %v321, %v378
      %v393 = vadd.f32 %v322, %v378
      %v394 = vadd.f32 %v323, %v378
      %v395 = vadd.f32 %v324, %v378
      %v396 = vadd.f32 %v325, %v378
      %v397 = vadd.f32 %v326, %v378
      %v398 = vadd.f32 %v327, %v378
      %v399 = vadd.f32 %v328, %v378
      %v400 = vadd.f32 %v329, %v378
      %v401 = vadd.f32 %v330, %v378
      %v402 = vadd.f32 %v331, %v378
      %v403 = vadd.f32 %v332, %v378
      %v404 = vadd.f32 %v333, %v378
      %v405 = vadd.f32 %v334, %v378
      %v406 = vadd.f32 %v335, %v378
      %v407 = vadd.f32 %v336, %v378
      %v408 = vadd.f32 %v337, %v378
      %v409 = vadd.f32 %v338, %v378
      %v410 = vadd.f32 %v339, %v378
      %v411 = vadd.f32 %v340, %v378
      %v412 = vadd.f32 %v341, %v378
      %v413 = vadd.f32 %v342, %v378
      %v414 = vadd.f32 %v343, %v378
      %v415 = vadd.f32 %v344, %v378
      %v416 = vadd.f32 %v345, %v378
      %v417 = vadd.f32 %v346, %v378
      %v418 = vadd.f32 %v347, %v378
      %v419 = vadd.f32 %v348, %v378
      %v420 = vadd.f32 %v349, %v378
      %v421 = vadd.f32 %v350, %v378
      %v422 = vadd.f32 %v351, %v378
      %v423 = vadd.f32 %v352, %v378
      %v424 = vadd.f32 %v353, %v378
      %v425 = vadd.f32 %v354, %v378
      %v426 = vadd.f32 %v355, %v378
      %v427 = vadd.f32 %v356, %v378
      %v428 = vadd.f32 %v357, %v378
      %v429 = vadd.f32 %v358, %v378
      %v430 = vadd.f32 %v359, %v378
      %v431 = vadd.f32 %v360, %v378
      %v432 = vadd.f32 %v361, %v378
      %v433 = vadd.f32 %v362, %v378
      %v434 = vadd.f32 %v363, %v378
      %v435 = vadd.f32 %v364, %v378
      %v436 = vadd.f32 %v365, %v378
      %v437 = vadd.f32 %v366, %v378
      %v438 = vadd.f32 %v367, %v378
      %v439 = vadd.f32 %v368, %v378
      %v440 = vadd.f32 %v369, %v378
      %v441 = vadd.f32 %v370, %v378
      %v442 = vadd.f32 %v371, %v378
      %v443 = vadd.f32 %v372, %v378
      %v444 = vmax.f32 %v380, 0.0
      %v445 = vmax.f32 %v381, 0.0
      %v446 = vmax.f32 %v382, 0.0
      %v447 = vmax.f32 %v383, 0.0
      %v448 = vmax.f32 %v384, 0.0
      %v449 = vmax.f32 %v385, 0.0
      %v450 = vmax.f32 %v386, 0.0
      %v451 = vmax.f32 %v387, 0.0
      %v452 = vmax.f32 %v388, 0.0
      %v453 = vmax.f32 %v389, 0.0
      %v454 = vmax.f32 %v390, 0.0
      %v455 = vmax.f32 %v391, 0.0
      %v456 = vmax.f32 %v392, 0.0
      %v457 = vmax.f32 %v393, 0.0
      %v458 = vmax.f32 %v394, 0.0
      %v459 = vmax.f32 %v395, 0.0
      %v460 = vmax.f32 %v396, 0.0
      %v461 = vmax.f32 %v397, 0.0
      %v462 = vmax.f32 %v398, 0.0
      %v463 = vmax.f32 %v399, 0.0
      %v464 = vmax.f32 %v400, 0.0
      %v465 = vmax.f32 %v401, 0.0
      %v466 = vmax.f32 %v402, 0.0
      %v467 = vmax.f32 %v403, 0.0
      %v468 = vmax.f32 %v404, 0.0
      %v469 = vmax.f32 %v405, 0.0
      %v470 = vmax.f32 %v406, 0.0
      %v471 = vmax.f32 %v407, 0.0
      %v472 = vmax.f32 %v408, 0.0
      %v473 = vmax.f32 %v409, 0.0
      %v474 = vmax.f32 %v410, 0.0
      %v475 = vmax.f32 %v411, 0.0
      %v476 = vmax.f32 %v412, 0.0
      %v477 = vmax.f32 %v413, 0.0
      %v478 = vmax.f32 %v414, 0.0
      %v479 = vmax.f32 %v415, 0.0
      %v480 = vmax.f32 %v416, 0.0
      %v481 = vmax.f32 %v417, 0.0
      %v482 = vmax.f32 %v418, 0.0
      %v483 = vmax.f32 %v419, 0.0
      %v484 = vmax.f32 %v420, 0.0
      %v485 = vmax.f32 %v421, 0.0
      %v486 = vmax.f32 %v422, 0.0
      %v487 = vmax.f32 %v423, 0.0
      %v488 = vmax.f32 %v424, 0.0
      %v489 = vmax.f32 %v425, 0.0
      %v490 = vmax.f32 %v426, 0.0
      %v491 = vmax.f32 %v427, 0.0
      %v492 = vmax.f32 %v428, 0.0
      %v493 = vmax.f32 %v429, 0.0
      %v494 = vmax.f32 %v430, 0.0
      %v495 = vmax.f32 %v431, 0.0
      %v496 = vmax.f32 %v432, 0.0
      %v497 = vmax.f32 %v433, 0.0
      %v498 = vmax.f32 %v434, 0.0
      %v499 = vmax.f32 %v435, 0.0
      %v500 = vmax.f32 %v436, 0.0
      %v501 = vmax.f32 %v437, 0.0
      %v502 = vmax.f32 %v438, 0.0
      %v503 = vmax.f32 %v439, 0.0
      %v504 = vmax.f32 %v440, 0.0
      %v505 = vmax.f32 %v441, 0.0
      %v506 = vmax.f32 %v442, 0.0
      %v507 = vmax.f32 %v443, 0.0
      %508 = vst [vmem:[%s172] sm:$0xff] %v444
      %509 = vst [vmem:[%s172 + $0x8] sm:$0xff] %v445
      %510 = vst [vmem:[%s172 + $0x10] sm:$0xff] %v446
      %511 = vst [vmem:[%s172 + $0x18] sm:$0xff] %v447
      %512 = vst [vmem:[%s172 + $0x20] sm:$0xff] %v448
      %513 = vst [vmem:[%s172 + $0x28] sm:$0xff] %v449
      %514 = vst [vmem:[%s172 + $0x30] sm:$0xff] %v450
      %515 = vst [vmem:[%s172 + $0x38] sm:$0xff] %v451
      %516 = vst [vmem:[%s172 + $0x40] sm:$0xff] %v452
      %517 = vst [vmem:[%s172 + $0x48] sm:$0xff] %v453
      %518 = vst [vmem:[%s172 + $0x50] sm:$0xff] %v454
      %519 = vst [vmem:[%s172 + $0x58] sm:$0xff] %v455
      %520 = vst [vmem:[%s172 + $0x60] sm:$0xff] %v456
      %521 = vst [vmem:[%s172 + $0x68] sm:$0xff] %v457
      %522 = vst [vmem:[%s172 + $0x70] sm:$0xff] %v458
      %523 = vst [vmem:[%s172 + $0x78] sm:$0xff] %v459
      %524 = vst [vmem:[%s172 + $0x80] sm:$0xff] %v460
      %525 = vst [vmem:[%s172 + $0x88] sm:$0xff] %v461
      %526 = vst [vmem:[%s172 + $0x90] sm:$0xff] %v462
      %527 = vst [vmem:[%s172 + $0x98] sm:$0xff] %v463
      %528 = vst [vmem:[%s172 + $0xa0] sm:$0xff] %v464
      %529 = vst [vmem:[%s172 + $0xa8] sm:$0xff] %v465
      %530 = vst [vmem:[%s172 + $0xb0] sm:$0xff] %v466
      %531 = vst [vmem:[%s172 + $0xb8] sm:$0xff] %v467
      %532 = vst [vmem:[%s172 + $0xc0] sm:$0xff] %v468
      %533 = vst [vmem:[%s172 + $0xc8] sm:$0xff] %v469
      %534 = vst [vmem:[%s172 + $0xd0] sm:$0xff] %v470
      %535 = vst [vmem:[%s172 + $0xd8] sm:$0xff] %v471
      %536 = vst [vmem:[%s172 + $0xe0] sm:$0xff] %v472
      %537 = vst [vmem:[%s172 + $0xe8] sm:$0xff] %v473
      %538 = vst [vmem:[%s172 + $0xf0] sm:$0xff] %v474
      %539 = vst [vmem:[%s172 + $0xf8] sm:$0xff] %v475
      %540 = vst [vmem:[%s172 + $0x100] sm:$0xff] %v476
      %541 = vst [vmem:[%s172 + $0x108] sm:$0xff] %v477
      %542 = vst [vmem:[%s172 + $0x110] sm:$0xff] %v478
      %543 = vst [vmem:[%s172 + $0x118] sm:$0xff] %v479
      %544 = vst [vmem:[%s172 + $0x120] sm:$0xff] %v480
      %545 = vst [vmem:[%s172 + $0x128] sm:$0xff] %v481
      %546 = vst [vmem:[%s172 + $0x130] sm:$0xff] %v482
      %547 = vst [vmem:[%s172 + $0x138] sm:$0xff] %v483
      %548 = vst [vmem:[%s172 + $0x140] sm:$0xff] %v484
      %549 = vst [vmem:[%s172 + $0x148] sm:$0xff] %v485
      %550 = vst [vmem:[%s172 + $0x150] sm:$0xff] %v486
      %551 = vst [vmem:[%s172 + $0x158] sm:$0xff] %v487
      %552 = vst [vmem:[%s172 + $0x160] sm:$0xff] %v488
      %553 = vst [vmem:[%s172 + $0x168] sm:$0xff] %v489
      %554 = vst [vmem:[%s172 + $0x170] sm:$0xff] %v490
      %555 = vst [vmem:[%s172 + $0x178] sm:$0xff] %v491
      %556 = vst [vmem:[%s172 + $0x180] sm:$0xff] %v492
      %557 = vst [vmem:[%s172 + $0x188] sm:$0xff] %v493
      %558 = vst [vmem:[%s172 + $0x190] sm:$0xff] %v494
      %559 = vst [vmem:[%s172 + $0x198] sm:$0xff] %v495
      %560 = vst [vmem:[%s172 + $0x1a0] sm:$0xff] %v496
      %561 = vst [vmem:[%s172 + $0x1a8] sm:$0xff] %v497
      %562 = vst [vmem:[%s172 + $0x1b0] sm:$0xff] %v498
      %563 = vst [vmem:[%s172 + $0x1b8] sm:$0xff] %v499
      %564 = vst [vmem:[%s172 + $0x1c0] sm:$0xff] %v500
      %565 = vst [vmem:[%s172 + $0x1c8] sm:$0xff] %v501
      %566 = vst [vmem:[%s172 + $0x1d0] sm:$0xff] %v502
      %567 = vst [vmem:[%s172 + $0x1d8] sm:$0xff] %v503
      %568 = vst [vmem:[%s172 + $0x1e0] sm:$0xff] %v504
      %569 = vst [vmem:[%s172 + $0x1e8] sm:$0xff] %v505
      %570 = vst [vmem:[%s172 + $0x1f0] sm:$0xff] %v506
      %571 = vst [vmem:[%s172 + $0x1f8] sm:$0xff] %v507
      %s572 = smul.u32 64, %s14
      %p573 = scmp.lt.s32.totalorder %s572, 127
      %s574 = scalar_select %p573, %s572, 127
      %s575 = smul.addr %s574, 8
      %s576 = scalar_lea.vmem %s3, %s575
      // Predicated region
      $region33: #{deconv_block_forward.3} parent=31 // pred_check
        %p577 = pneg %p100
      $region34: #{deconv_block_forward.3} parent=31 // pred_check_branch
        %579 = sbr.rel (%p577) target = $region36
      $region35: #{deconv_block_forward.3} parent=31 // pred_region
        %s580 = smul.u32 64, %s14
      $region36: #{deconv_block_forward.3} parent=31 // pred_fallthru
        _
    $region32: #{deconv_block_forward.3} parent=5 // pred_fallthru
      _
    %p581 = scmp.le.s32.totalorder 2, %s9
    // Predicated region
    $region37: #{deconv_block_forward.3} parent=5 // pred_check
      %p582 = pneg %p581
    $region38: #{deconv_block_forward.3} parent=5 // pred_check_branch
      %584 = sbr.rel (%p582) target = $region40
    $region39: #{deconv_block_forward.3} parent=5 // pred_region
      %s585 = ssub.s32 %s9, 2
      // Predicated region
      $region41: #{deconv_block_forward.3} parent=39 // pred_check
        %p586 = pneg %p106
      $region42: #{deconv_block_forward.3} parent=39 // pred_check_branch
        %588 = sbr.rel (%p586) target = $region44
      $region43: #{deconv_block_forward.3} parent=39 // pred_region
        %s589 = smul.u32 64, %s15
        %p590 = scmp.lt.s32.totalorder %s589, 127
        %s591 = scalar_select %p590, %s589, 127
        %s592 = smul.addr %s591, 8
        %s593 = scalar_lea.vmem %s3, %s592
      $region44: #{deconv_block_forward.3} parent=39 // pred_fallthru
        _
    $region40: #{deconv_block_forward.3} parent=5 // pred_fallthru
      _
  $region6: #{deconv_block_forward.3} parent=0 // loop_footer
    %s13 = sadd.s32 1, %s9
  $region7: #{deconv_block_forward.3} parent=0 // loop_footer_branch
    %8 = sbr.rel target = $region3
  $region8: #{deconv_block_forward.3} parent=0 // loop_exit
    _

</llo_original>
